<compile_context>
chip_gen: v6e
topology: v6e:2x2x1
jax: 0.10.0
libtpu: 0.0.40
codegen_flags: <defaults>
</compile_context>

<pallas_src>
import functools

import jax
import jax.numpy as jnp
from jax import lax
from jax.experimental import pallas as pl
from jax.experimental.pallas import tpu as pltpu


LN_EPS = 1e-5  # torch.nn.LayerNorm default


def _pick_batch_block(B, T, *, target_rows=512, min_grid_steps=2):
    """Per-step batch block.

    Fill the MXU M-dimension (block_b * T rows) up to ~target_rows (>=256 is useful on v6e/v7x,
    >=128 on v5e), but keep at least `min_grid_steps` grid steps so v7x's two TensorCores both
    get work and the DMA/compute pipeline has something to overlap.
    """
    divs = [d for d in range(1, B + 1) if B % d == 0]
    cands = [d for d in divs if B // d >= min_grid_steps] or divs
    fitting = [d for d in cands if d * T <= target_rows] or [min(cands)]
    return max(fitting)


def _vmem_limit_bytes(block_b, N, Nx, D, io_itemsize):
    """Rough VMEM budget: double-buffered I/O blocks + double-buffered bf16 weights + f32 slabs."""
    io = 2 * io_itemsize * block_b * D * (2 * N + Nx)          # M, x, out blocks (x2 buffers)
    weights = 2 * 2 * (3 * D * D + 2 * D * D)                  # wqkv, w1, w2 in bf16 (x2 buffers)
    vecs = 2 * 4 * 6 * D                                       # LayerNorm / bias params (f32)
    act = 4 * block_b * (3 * N * D + 2 * Nx * D + 6 * N * D)   # f32 working slabs (rough)
    est = io + weights + vecs + act
    # generous headroom for spills / internal scratch; stay under v7x's 64 MiB physical VMEM
    return int(min(max(32 << 20, 2 * est), 48 << 20))


def _layernorm(u, g, b):
    mu = jnp.mean(u, axis=-1, keepdims=True)
    var = jnp.mean(jnp.square(u - mu), axis=-1, keepdims=True)
    return (u - mu) * lax.rsqrt(var + LN_EPS) * g + b


def _rmc_kernel(m_ref, x_ref, wqkv_ref, g1_ref, be1_ref,
                w1_ref, b1_ref, w2_ref, b2_ref, g2_ref, be2_ref,
                o_ref, *, H, N, Nx):
    """Transformer block over [memory ; inputs] for a block of batch elements (BB batches)."""
    BB = m_ref.shape[0]
    D = m_ref.shape[2]
    Dh = D // H
    f32, bf16 = jnp.float32, jnp.bfloat16

    m_val = m_ref[...]                                   # [BB, N, D]   memory rows
    x_val = x_ref[...]                                   # [BB, Nx, D]  appended input rows
    wqkv = wqkv_ref[...]                                 # [D, 3D] bf16, q-scale pre-folded

    # --- QKV projection.  Only the N memory rows reach the output, so Q is computed for them
    # --- alone; the Nx input rows only contribute keys / values.
    qkv_m = jnp.dot(m_val.reshape(BB * N, D).astype(bf16), wqkv,
                    preferred_element_type=f32)           # [BB*N, 3D]
    kv_x = jnp.dot(x_val.reshape(BB * Nx, D).astype(bf16), wqkv[:, D:],
                   preferred_element_type=f32)            # [BB*Nx, 2D]

    q = qkv_m[:, :D].astype(bf16).reshape(BB, N, D)
    km = qkv_m[:, D:2 * D].astype(bf16).reshape(BB, N, D)
    vm = qkv_m[:, 2 * D:].astype(bf16).reshape(BB, N, D)
    kx = kv_x[:, :D].astype(bf16).reshape(BB, Nx, D)
    vx = kv_x[:, D:].astype(bf16).reshape(BB, Nx, D)

    # --- attention: softmax over the destination/key axis (scatter_softmax grouped by src),
    # --- streamed over the two dest blocks so the concatenated [BB,T,D] slab is never built.
    if H == 1:
        s_m = jnp.einsum('bqd,bkd->bqk', q, km, preferred_element_type=f32)   # [BB, N, N]
        s_x = jnp.einsum('bqd,bkd->bqk', q, kx, preferred_element_type=f32)   # [BB, N, Nx]
        mx = jnp.maximum(jnp.max(s_m, -1, keepdims=True), jnp.max(s_x, -1, keepdims=True))
        e_m, e_x = jnp.exp(s_m - mx), jnp.exp(s_x - mx)
        inv = 1.0 / (jnp.sum(e_m, -1, keepdims=True) + jnp.sum(e_x, -1, keepdims=True))
        attn = (jnp.einsum('bqk,bkd->bqd', (e_m * inv).astype(bf16), vm,
                           preferred_element_type=f32)
                + jnp.einsum('bqk,bkd->bqd', (e_x * inv).astype(bf16), vx,
                             preferred_element_type=f32))                     # [BB, N, D]
    else:
        # TODO(synk): untested for H > 1 (RMCSparse only type-checks at h == 1); pre-layout
        # wqkv head-major / pad Dh to 128 before enabling so the Dh slices are lane-aligned.
        qh = q.reshape(BB, N, H, Dh)
        s_m = jnp.einsum('bqhc,bkhc->bhqk', qh, km.reshape(BB, N, H, Dh),
                         preferred_element_type=f32)
        s_x = jnp.einsum('bqhc,bkhc->bhqk', qh, kx.reshape(BB, Nx, H, Dh),
                         preferred_element_type=f32)
        mx = jnp.maximum(jnp.max(s_m, -1, keepdims=True), jnp.max(s_x, -1, keepdims=True))
        e_m, e_x = jnp.exp(s_m - mx), jnp.exp(s_x - mx)
        inv = 1.0 / (jnp.sum(e_m, -1, keepdims=True) + jnp.sum(e_x, -1, keepdims=True))
        attn = (jnp.einsum('bhqk,bkhc->bqhc', (e_m * inv).astype(bf16),
                           vm.reshape(BB, N, H, Dh), preferred_element_type=f32)
                + jnp.einsum('bhqk,bkhc->bqhc', (e_x * inv).astype(bf16),
                             vx.reshape(BB, Nx, H, Dh), preferred_element_type=f32)
                ).reshape(BB, N, D)

    # --- residual + LN1 -> MLP -> residual + LN2, only for the N memory rows (f32 math) -------
    x_mem = m_val.astype(f32).reshape(BB * N, D)
    y = _layernorm(x_mem + attn.reshape(BB * N, D), g1_ref[...], be1_ref[...])

    h1 = jnp.dot(y.astype(bf16), w1_ref[...], preferred_element_type=f32) + b1_ref[...]
    h1 = jnp.maximum(h1, 0.0)
    z = jnp.dot(h1.astype(bf16), w2_ref[...], preferred_element_type=f32) + b2_ref[...]

    out = _layernorm(y + z, g2_ref[...], be2_ref[...])
    o_ref[...] = out.reshape(BB, N, D).astype(o_ref.dtype)


def rmc_forward(M, x, params, H, *, block_b=None, target_rows=512, min_grid_steps=2,
                alias_memory=False):
    """RMC step: new_M = TransformerBlockSparse(concat([M, x], axis=1), fully-connected)[:, :N].

    M, x (and the output) are expected in bf16 in HBM; all elementwise math is f32 in-kernel.
    Set alias_memory=True (with a donated M) to update the memory buffer in place.
    """
    B, N, D = M.shape
    Nx = x.shape[1]
    assert x.shape[0] == B and x.shape[2] == D
    assert D % H == 0
    if block_b is None:
        block_b = _pick_batch_block(B, N + Nx, target_rows=target_rows,
                                    min_grid_steps=min_grid_steps)
    assert B % block_b == 0, "block_b must divide the batch"

    kernel = functools.partial(_rmc_kernel, H=H, N=N, Nx=Nx)

    def rep(shape):
        # Weight / param blocks: constant index map -> DMA'd once, reused by every grid step.
        # TODO(synk): at D >= ~1024, mark these grid-invariant specs pipeline_mode=pl.Buffered(1)
        # to halve their VMEM footprint on v7x (64 MiB physical); left default here.
        nd = len(shape)
        return pl.BlockSpec(shape, lambda b, _nd=nd: (0,) * _nd)

    in_specs = [
        pl.BlockSpec((block_b, N, D), lambda b: (b, 0, 0)),    # memory M   (bf16)
        pl.BlockSpec((block_b, Nx, D), lambda b: (b, 0, 0)),   # inputs x   (bf16)
        rep((D, 3 * D)),                                       # W_qkv (bf16, q-scaled)
        rep((1, D)), rep((1, D)),                              # ln1 gamma, beta (f32)
        rep((D, D)), rep((1, D)),                              # mlp W1 (bf16), b1 (f32)
        rep((D, D)), rep((1, D)),                              # mlp W2 (bf16), b2 (f32)
        rep((1, D)), rep((1, D)),                              # ln2 gamma, beta (f32)
    ]
    out_specs = pl.BlockSpec((block_b, N, D), lambda b: (b, 0, 0))

    return pl.pallas_call(
        kernel,
        out_shape=jax.ShapeDtypeStruct((B, N, D), M.dtype),
        grid=(B // block_b,),
        in_specs=in_specs,
        out_specs=out_specs,
        input_output_aliases={0: 0} if alias_memory else {},
        compiler_params=pltpu.CompilerParams(
            # "parallel" lets v7x shard the batch-block axis across its two TensorCores
            # (pltpu.CORE_PARALLEL is a measurement-worthy alternative on v7x).
            dimension_semantics=("parallel",),
            vmem_limit_bytes=_vmem_limit_bytes(block_b, N, Nx, D,
                                               jnp.dtype(M.dtype).itemsize)),
    )(M, x,
      params["wqkv"],
      params["g1"], params["be1"],
      params["w1"], params["b1"],
      params["w2"], params["b2"],
      params["g2"], params["be2"])


def prepare_params(p, H):
    """Fold the q scaling (Fh**-0.5) into wqkv's first D columns and cast matmul weights to bf16.

    Layouts: "wqkv" = proj.weight.T ([D, 3D], split q|k|v); "w1"/"w2" = Linear.weight.T.
    """
    D = p["w1"].shape[0]
    Dh = D // H
    scaling = float(Dh) ** -0.5
    wqkv = p["wqkv"].astype(jnp.float32).at[:, :D].multiply(scaling)
    f32 = lambda a: a.astype(jnp.float32)
    return {
        "wqkv": wqkv.astype(jnp.bfloat16),
        "w1": p["w1"].astype(jnp.bfloat16), "b1": f32(p["b1"]),
        "w2": p["w2"].astype(jnp.bfloat16), "b2": f32(p["b2"]),
        "g1": f32(p["g1"]), "be1": f32(p["be1"]),
        "g2": f32(p["g2"]), "be2": f32(p["be2"]),
    }


# ------------------------- pure-JAX edge-list reference (mirrors the torch spec) ----------------
def _ref_rmc_sparse(M, x, p, H):
    """Edge-list reference of SelfAttentionLayerSparse + scatter_softmax/scatter_sum +
    TransformerBlockSparse on the fully-connected intra-batch graph the RMC step implies.
    Matmul operands are rounded to bf16 exactly like the kernel so the comparison is tight."""
    B, N, D = M.shape
    Nx = x.shape[1]
    T = N + Nx
    Dh = D // H
    f32, bf16 = jnp.float32, jnp.bfloat16
    rb = lambda a: a.astype(bf16).astype(f32)                      # round-to-bf16 helper
    mm = lambda a, w: jnp.dot(a.astype(bf16), w, preferred_element_type=f32)

    nodes = jnp.concatenate([M, x], axis=1).reshape(B * T, D)
    # fully-connected edges (self-loops included) inside each batch element, like the example ei
    be = jnp.repeat(jnp.arange(B), T * T)
    src = be * T + jnp.tile(jnp.repeat(jnp.arange(T), T), B)
    dest = be * T + jnp.tile(jnp.arange(T), B * T)

    qkv = mm(nodes, p["wqkv"])                                     # q scaling folded into wqkv
    q = qkv[:, :D].reshape(-1, H, Dh)
    k = qkv[:, D:2 * D].reshape(-1, H, Dh)
    v = qkv[:, 2 * D:].reshape(-1, H, Dh)
    qs, ks, vs = rb(q[src]), rb(k[dest]), rb(v[dest])
    aw = jnp.sum(qs * ks, axis=-1)                                 # [E, H] per-edge scores
    # scatter_softmax over src: per source node, normalize over its outgoing edges
    expw = jnp.exp(aw)
    aw = expw / jax.ops.segment_sum(expw, src, num_segments=B * T)[src]
    # scatter_sum over src of aw * v[dest]
    out = jax.ops.segment_sum(rb(aw)[..., None] * vs, src, num_segments=B * T)
    attn = out.reshape(B * T, H * Dh)

    def ln(u, g, b):
        mu = u.mean(-1, keepdims=True)
        var = ((u - mu) ** 2).mean(-1, keepdims=True)
        return (u - mu) * lax.rsqrt(var + LN_EPS) * g + b

    y = ln(nodes.astype(f32) + attn, p["g1"], p["be1"])
    z = jnp.maximum(mm(y, p["w1"]) + p["b1"], 0.0)
    z = mm(z, p["w2"]) + p["b2"]
    out = ln(y + z, p["g2"], p["be2"])
    return out.reshape(B, T, D)[:, :N].astype(M.dtype)


# --------------------------------------------- demo ---------------------------------------------
if __name__ == "__main__":
    # RMCSparse(N, d, h, b): N memory slots, d features, h heads, batch b.
    # h must be 1 for the torch module's shapes to be consistent (M has d*h features, block wants d).
    N, d, h, b = 4, 128, 1, 4
    Nx = 4                               # input tokens appended to the memory each step
    D = d

    key = jax.random.PRNGKey(0)
    ks = jax.random.split(key, 12)
    scale = 0.05
    raw_params = {
        "wqkv": scale * jax.random.normal(ks[0], (D, 3 * D), jnp.float32),   # proj.weight.T
        "g1":   1.0 + 0.1 * jax.random.normal(ks[1], (1, D), jnp.float32),
        "be1":  0.1 * jax.random.normal(ks[2], (1, D), jnp.float32),
        "w1":   scale * jax.random.normal(ks[3], (D, D), jnp.float32),
        "b1":   0.1 * jax.random.normal(ks[4], (1, D), jnp.float32),
        "w2":   scale * jax.random.normal(ks[5], (D, D), jnp.float32),
        "b2":   0.1 * jax.random.normal(ks[6], (1, D), jnp.float32),
        "g2":   1.0 + 0.1 * jax.random.normal(ks[7], (1, D), jnp.float32),
        "be2":  0.1 * jax.random.normal(ks[8], (1, D), jnp.float32),
    }
    params = prepare_params(raw_params, h)

    # Memory / inputs live as bf16 in HBM (perf review: halves HBM traffic, biggest win on v5e).
    # The torch buffer starts at zeros; a non-zero memory state is used so the attention path is
    # actually exercised by the check.
    M0 = jax.random.normal(ks[9], (b, N, D), jnp.float32).astype(jnp.bfloat16)
    x = jax.random.normal(ks[10], (b, Nx, D), jnp.float32).astype(jnp.bfloat16)

    new_M = jax.block_until_ready(rmc_forward(M0, x, params, h))
    assert new_M.shape == (b, N, D) and new_M.dtype == M0.dtype

    ref_M = _ref_rmc_sparse(M0, x, params, h)
    ok = jnp.allclose(new_M.astype(jnp.float32), ref_M.astype(jnp.float32),
                      rtol=2e-2, atol=2e-2)
    assert ok, ("mismatch vs sparse edge-list reference, max abs err = "
                f"{jnp.max(jnp.abs(new_M.astype(jnp.float32) - ref_M.astype(jnp.float32)))}")

    print("KERNEL_OK")
</pallas_src>

<mosaic_0001>
module attributes {stable_mosaic.version = 11 : i64} {
  func.func @_rmc_kernel(%arg0: i32, %arg1: memref<2x4x128xbf16, #tpu.memory_space<vmem>>, %arg2: memref<2x4x128xbf16, #tpu.memory_space<vmem>>, %arg3: memref<128x384xbf16, #tpu.memory_space<vmem>>, %arg4: memref<1x128xf32, #tpu.memory_space<vmem>>, %arg5: memref<1x128xf32, #tpu.memory_space<vmem>>, %arg6: memref<128x128xbf16, #tpu.memory_space<vmem>>, %arg7: memref<1x128xf32, #tpu.memory_space<vmem>>, %arg8: memref<128x128xbf16, #tpu.memory_space<vmem>>, %arg9: memref<1x128xf32, #tpu.memory_space<vmem>>, %arg10: memref<1x128xf32, #tpu.memory_space<vmem>>, %arg11: memref<1x128xf32, #tpu.memory_space<vmem>>, %arg12: memref<2x4x128xbf16, #tpu.memory_space<vmem>>) attributes {dimension_semantics = [#tpu.dimension_semantics<parallel>], iteration_bounds = array<i64: 2>, scalar_prefetch = 0 : i64, scratch_operands = 0 : i64, tpu.core_type = #tpu.core_type<tc>, window_params = [{transform_indices = @transform_0, window_bounds = array<i64: 2, 4, 128>}, {transform_indices = @transform_1, window_bounds = array<i64: 2, 4, 128>}, {pipeline_mode = #tpu.pipeline_mode<synchronous>, transform_indices = @transform_2, window_bounds = array<i64: 128, 384>}, {pipeline_mode = #tpu.pipeline_mode<synchronous>, transform_indices = @transform_3, window_bounds = array<i64: 1, 128>}, {pipeline_mode = #tpu.pipeline_mode<synchronous>, transform_indices = @transform_4, window_bounds = array<i64: 1, 128>}, {pipeline_mode = #tpu.pipeline_mode<synchronous>, transform_indices = @transform_5, window_bounds = array<i64: 128, 128>}, {pipeline_mode = #tpu.pipeline_mode<synchronous>, transform_indices = @transform_6, window_bounds = array<i64: 1, 128>}, {pipeline_mode = #tpu.pipeline_mode<synchronous>, transform_indices = @transform_7, window_bounds = array<i64: 128, 128>}, {pipeline_mode = #tpu.pipeline_mode<synchronous>, transform_indices = @transform_8, window_bounds = array<i64: 1, 128>}, {pipeline_mode = #tpu.pipeline_mode<synchronous>, transform_indices = @transform_9, window_bounds = array<i64: 1, 128>}, {pipeline_mode = #tpu.pipeline_mode<synchronous>, transform_indices = @transform_10, window_bounds = array<i64: 1, 128>}, {transform_indices = @transform_11, window_bounds = array<i64: 2, 4, 128>}]} {
    %c0 = arith.constant 0 : index
    %c0_0 = arith.constant 0 : index
    %c0_1 = arith.constant 0 : index
    %0 = vector.load %arg1[%c0, %c0_0, %c0_1] : memref<2x4x128xbf16, #tpu.memory_space<vmem>>, vector<2x4x128xbf16>
    %c0_2 = arith.constant 0 : index
    %c0_3 = arith.constant 0 : index
    %c0_4 = arith.constant 0 : index
    %1 = vector.load %arg2[%c0_2, %c0_3, %c0_4] : memref<2x4x128xbf16, #tpu.memory_space<vmem>>, vector<2x4x128xbf16>
    %c0_5 = arith.constant 0 : index
    %c0_6 = arith.constant 0 : index
    %2 = vector.load %arg3[%c0_5, %c0_6] : memref<128x384xbf16, #tpu.memory_space<vmem>>, vector<128x384xbf16>
    %3 = vector.shape_cast %0 : vector<2x4x128xbf16> to vector<8x128xbf16>
    %cst = arith.constant dense<0.000000e+00> : vector<8x384xf32>
    %4 = tpu.matmul %3, %2, %cst {dimension_numbers = #tpu.dot_dimension_numbers<[1], [0], [0], [1], [0, 0, 1, 1], [], []>} : vector<8x128xbf16>, vector<128x384xbf16>, vector<8x384xf32> -> vector<8x384xf32>
    %5 = vector.shape_cast %1 : vector<2x4x128xbf16> to vector<8x128xbf16>
    %6 = vector.extract_strided_slice %2 {offsets = [0, 128], sizes = [128, 256], strides = [1, 1]} : vector<128x384xbf16> to vector<128x256xbf16>
    %cst_7 = arith.constant dense<0.000000e+00> : vector<8x256xf32>
    %7 = tpu.matmul %5, %6, %cst_7 {dimension_numbers = #tpu.dot_dimension_numbers<[1], [0], [0], [1], [0, 0, 1, 1], [], []>} : vector<8x128xbf16>, vector<128x256xbf16>, vector<8x256xf32> -> vector<8x256xf32>
    %8 = vector.extract_strided_slice %4 {offsets = [0, 0], sizes = [8, 128], strides = [1, 1]} : vector<8x384xf32> to vector<8x128xf32>
    %9 = arith.truncf %8 : vector<8x128xf32> to vector<8x128xbf16>
    %10 = vector.shape_cast %9 : vector<8x128xbf16> to vector<2x4x128xbf16>
    %11 = vector.extract_strided_slice %4 {offsets = [0, 128], sizes = [8, 128], strides = [1, 1]} : vector<8x384xf32> to vector<8x128xf32>
    %12 = arith.truncf %11 : vector<8x128xf32> to vector<8x128xbf16>
    %13 = vector.shape_cast %12 : vector<8x128xbf16> to vector<2x4x128xbf16>
    %14 = vector.extract_strided_slice %4 {offsets = [0, 256], sizes = [8, 128], strides = [1, 1]} : vector<8x384xf32> to vector<8x128xf32>
    %15 = arith.truncf %14 : vector<8x128xf32> to vector<8x128xbf16>
    %16 = vector.shape_cast %15 : vector<8x128xbf16> to vector<2x4x128xbf16>
    %17 = vector.extract_strided_slice %7 {offsets = [0, 0], sizes = [8, 128], strides = [1, 1]} : vector<8x256xf32> to vector<8x128xf32>
    %18 = arith.truncf %17 : vector<8x128xf32> to vector<8x128xbf16>
    %19 = vector.shape_cast %18 : vector<8x128xbf16> to vector<2x4x128xbf16>
    %20 = vector.extract_strided_slice %7 {offsets = [0, 128], sizes = [8, 128], strides = [1, 1]} : vector<8x256xf32> to vector<8x128xf32>
    %21 = arith.truncf %20 : vector<8x128xf32> to vector<8x128xbf16>
    %22 = vector.shape_cast %21 : vector<8x128xbf16> to vector<2x4x128xbf16>
    "tpu.trace_start"() <{level = 10 : i32, message = "bqd,bkd->bqk"}> : () -> ()
    %cst_8 = arith.constant dense<0.000000e+00> : vector<2x4x4xf32>
    %23 = tpu.matmul %10, %13, %cst_8 {dimension_numbers = #tpu.dot_dimension_numbers<[2], [2], [1], [1], [0, 0, 0, 1, 1, 1], [0], [0]>} : vector<2x4x128xbf16>, vector<2x4x128xbf16>, vector<2x4x4xf32> -> vector<2x4x4xf32>
    %cst_9 = arith.constant dense<0.000000e+00> : vector<2x4x4xf32>
    %24 = tpu.matmul %10, %19, %cst_9 {dimension_numbers = #tpu.dot_dimension_numbers<[2], [2], [1], [1], [0, 0, 0, 1, 1, 1], [0], [0]>} : vector<2x4x128xbf16>, vector<2x4x128xbf16>, vector<2x4x4xf32> -> vector<2x4x4xf32>
    "tpu.trace_stop"() : () -> ()
    %cst_10 = arith.constant dense<0xFF800000> : vector<2x4xf32>
    %25 = vector.multi_reduction <maximumf>, %23, %cst_10 [2] : vector<2x4x4xf32> to vector<2x4xf32>
    %26 = vector.shape_cast %25 : vector<2x4xf32> to vector<2x4x1xf32>
    %cst_11 = arith.constant dense<0xFF800000> : vector<2x4xf32>
    %27 = vector.multi_reduction <maximumf>, %24, %cst_11 [2] : vector<2x4x4xf32> to vector<2x4xf32>
    %28 = vector.shape_cast %27 : vector<2x4xf32> to vector<2x4x1xf32>
    %29 = arith.maximumf %26, %28 : vector<2x4x1xf32>
    %30 = vector.broadcast %29 : vector<2x4x1xf32> to vector<2x4x4xf32>
    %31 = arith.subf %23, %30 : vector<2x4x4xf32>
    %32 = math.exp %31 : vector<2x4x4xf32>
    %33 = vector.broadcast %29 : vector<2x4x1xf32> to vector<2x4x4xf32>
    %34 = arith.subf %24, %33 : vector<2x4x4xf32>
    %35 = math.exp %34 : vector<2x4x4xf32>
    %cst_12 = arith.constant dense<0.000000e+00> : vector<2x4xf32>
    %36 = vector.multi_reduction <add>, %32, %cst_12 [2] : vector<2x4x4xf32> to vector<2x4xf32>
    %37 = vector.shape_cast %36 : vector<2x4xf32> to vector<2x4x1xf32>
    %cst_13 = arith.constant dense<0.000000e+00> : vector<2x4xf32>
    %38 = vector.multi_reduction <add>, %35, %cst_13 [2] : vector<2x4x4xf32> to vector<2x4xf32>
    %39 = vector.shape_cast %38 : vector<2x4xf32> to vector<2x4x1xf32>
    %40 = arith.addf %37, %39 : vector<2x4x1xf32>
    %cst_14 = arith.constant 1.000000e+00 : f32
    %41 = vector.broadcast %cst_14 : f32 to vector<2x4x1xf32>
    %42 = arith.divf %41, %40 : vector<2x4x1xf32>
    %43 = vector.broadcast %42 : vector<2x4x1xf32> to vector<2x4x4xf32>
    %44 = arith.mulf %32, %43 : vector<2x4x4xf32>
    %45 = arith.truncf %44 : vector<2x4x4xf32> to vector<2x4x4xbf16>
    "tpu.trace_start"() <{level = 10 : i32, message = "bqk,bkd->bqd"}> : () -> ()
    %cst_15 = arith.constant dense<0.000000e+00> : vector<2x4x128xf32>
    %46 = tpu.matmul %45, %16, %cst_15 {dimension_numbers = #tpu.dot_dimension_numbers<[2], [1], [1], [2], [0, 0, 0, 1, 1, 2], [0], [0]>} : vector<2x4x4xbf16>, vector<2x4x128xbf16>, vector<2x4x128xf32> -> vector<2x4x128xf32>
    "tpu.trace_stop"() : () -> ()
    %47 = vector.broadcast %42 : vector<2x4x1xf32> to vector<2x4x4xf32>
    %48 = arith.mulf %35, %47 : vector<2x4x4xf32>
    %49 = arith.truncf %48 : vector<2x4x4xf32> to vector<2x4x4xbf16>
    "tpu.trace_start"() <{level = 10 : i32, message = "bqk,bkd->bqd"}> : () -> ()
    %cst_16 = arith.constant dense<0.000000e+00> : vector<2x4x128xf32>
    %50 = tpu.matmul %49, %22, %cst_16 {dimension_numbers = #tpu.dot_dimension_numbers<[2], [1], [1], [2], [0, 0, 0, 1, 1, 2], [0], [0]>} : vector<2x4x4xbf16>, vector<2x4x128xbf16>, vector<2x4x128xf32> -> vector<2x4x128xf32>
    "tpu.trace_stop"() : () -> ()
    %51 = arith.addf %46, %50 : vector<2x4x128xf32>
    %52 = arith.extf %0 : vector<2x4x128xbf16> to vector<2x4x128xf32>
    %53 = vector.shape_cast %52 : vector<2x4x128xf32> to vector<8x128xf32>
    %54 = vector.shape_cast %51 : vector<2x4x128xf32> to vector<8x128xf32>
    %55 = arith.addf %53, %54 : vector<8x128xf32>
    %c0_17 = arith.constant 0 : index
    %c0_18 = arith.constant 0 : index
    %56 = vector.load %arg4[%c0_17, %c0_18] : memref<1x128xf32, #tpu.memory_space<vmem>>, vector<1x128xf32>
    %c0_19 = arith.constant 0 : index
    %c0_20 = arith.constant 0 : index
    %57 = vector.load %arg5[%c0_19, %c0_20] : memref<1x128xf32, #tpu.memory_space<vmem>>, vector<1x128xf32>
    %cst_21 = arith.constant dense<0.000000e+00> : vector<8xf32>
    %58 = vector.multi_reduction <add>, %55, %cst_21 [1] : vector<8x128xf32> to vector<8xf32>
    %59 = vector.shape_cast %58 : vector<8xf32> to vector<8x1xf32>
    %cst_22 = arith.constant 1.280000e+02 : f32
    %60 = vector.broadcast %cst_22 : f32 to vector<8x1xf32>
    %61 = arith.divf %59, %60 : vector<8x1xf32>
    %62 = vector.broadcast %61 : vector<8x1xf32> to vector<8x128xf32>
    %63 = arith.subf %55, %62 : vector<8x128xf32>
    %64 = arith.mulf %63, %63 : vector<8x128xf32>
    %cst_23 = arith.constant dense<0.000000e+00> : vector<8xf32>
    %65 = vector.multi_reduction <add>, %64, %cst_23 [1] : vector<8x128xf32> to vector<8xf32>
    %66 = vector.shape_cast %65 : vector<8xf32> to vector<8x1xf32>
    %cst_24 = arith.constant 1.280000e+02 : f32
    %67 = vector.broadcast %cst_24 : f32 to vector<8x1xf32>
    %68 = arith.divf %66, %67 : vector<8x1xf32>
    %69 = vector.broadcast %61 : vector<8x1xf32> to vector<8x128xf32>
    %70 = arith.subf %55, %69 : vector<8x128xf32>
    %cst_25 = arith.constant 9.99999974E-6 : f32
    %71 = vector.broadcast %cst_25 : f32 to vector<8x1xf32>
    %72 = arith.addf %68, %71 : vector<8x1xf32>
    %73 = math.rsqrt %72 : vector<8x1xf32>
    %74 = vector.broadcast %73 : vector<8x1xf32> to vector<8x128xf32>
    %75 = arith.mulf %70, %74 : vector<8x128xf32>
    %76 = vector.broadcast %56 : vector<1x128xf32> to vector<8x128xf32>
    %77 = arith.mulf %75, %76 : vector<8x128xf32>
    %78 = vector.broadcast %57 : vector<1x128xf32> to vector<8x128xf32>
    %79 = arith.addf %77, %78 : vector<8x128xf32>
    %80 = arith.truncf %79 : vector<8x128xf32> to vector<8x128xbf16>
    %c0_26 = arith.constant 0 : index
    %c0_27 = arith.constant 0 : index
    %81 = vector.load %arg6[%c0_26, %c0_27] : memref<128x128xbf16, #tpu.memory_space<vmem>>, vector<128x128xbf16>
    %cst_28 = arith.constant dense<0.000000e+00> : vector<8x128xf32>
    %82 = tpu.matmul %80, %81, %cst_28 {dimension_numbers = #tpu.dot_dimension_numbers<[1], [0], [0], [1], [0, 0, 1, 1], [], []>} : vector<8x128xbf16>, vector<128x128xbf16>, vector<8x128xf32> -> vector<8x128xf32>
    %c0_29 = arith.constant 0 : index
    %c0_30 = arith.constant 0 : index
    %83 = vector.load %arg7[%c0_29, %c0_30] : memref<1x128xf32, #tpu.memory_space<vmem>>, vector<1x128xf32>
    %84 = vector.broadcast %83 : vector<1x128xf32> to vector<8x128xf32>
    %85 = arith.addf %82, %84 : vector<8x128xf32>
    %cst_31 = arith.constant 0.000000e+00 : f32
    %86 = vector.broadcast %cst_31 : f32 to vector<8x128xf32>
    %87 = arith.maximumf %85, %86 : vector<8x128xf32>
    %88 = arith.truncf %87 : vector<8x128xf32> to vector<8x128xbf16>
    %c0_32 = arith.constant 0 : index
    %c0_33 = arith.constant 0 : index
    %89 = vector.load %arg8[%c0_32, %c0_33] : memref<128x128xbf16, #tpu.memory_space<vmem>>, vector<128x128xbf16>
    %cst_34 = arith.constant dense<0.000000e+00> : vector<8x128xf32>
    %90 = tpu.matmul %88, %89, %cst_34 {dimension_numbers = #tpu.dot_dimension_numbers<[1], [0], [0], [1], [0, 0, 1, 1], [], []>} : vector<8x128xbf16>, vector<128x128xbf16>, vector<8x128xf32> -> vector<8x128xf32>
    %c0_35 = arith.constant 0 : index
    %c0_36 = arith.constant 0 : index
    %91 = vector.load %arg9[%c0_35, %c0_36] : memref<1x128xf32, #tpu.memory_space<vmem>>, vector<1x128xf32>
    %92 = vector.broadcast %91 : vector<1x128xf32> to vector<8x128xf32>
    %93 = arith.addf %90, %92 : vector<8x128xf32>
    %94 = arith.addf %79, %93 : vector<8x128xf32>
    %c0_37 = arith.constant 0 : index
    %c0_38 = arith.constant 0 : index
    %95 = vector.load %arg10[%c0_37, %c0_38] : memref<1x128xf32, #tpu.memory_space<vmem>>, vector<1x128xf32>
    %c0_39 = arith.constant 0 : index
    %c0_40 = arith.constant 0 : index
    %96 = vector.load %arg11[%c0_39, %c0_40] : memref<1x128xf32, #tpu.memory_space<vmem>>, vector<1x128xf32>
    %cst_41 = arith.constant dense<0.000000e+00> : vector<8xf32>
    %97 = vector.multi_reduction <add>, %94, %cst_41 [1] : vector<8x128xf32> to vector<8xf32>
    %98 = vector.shape_cast %97 : vector<8xf32> to vector<8x1xf32>
    %cst_42 = arith.constant 1.280000e+02 : f32
    %99 = vector.broadcast %cst_42 : f32 to vector<8x1xf32>
    %100 = arith.divf %98, %99 : vector<8x1xf32>
    %101 = vector.broadcast %100 : vector<8x1xf32> to vector<8x128xf32>
    %102 = arith.subf %94, %101 : vector<8x128xf32>
    %103 = arith.mulf %102, %102 : vector<8x128xf32>
    %cst_43 = arith.constant dense<0.000000e+00> : vector<8xf32>
    %104 = vector.multi_reduction <add>, %103, %cst_43 [1] : vector<8x128xf32> to vector<8xf32>
    %105 = vector.shape_cast %104 : vector<8xf32> to vector<8x1xf32>
    %cst_44 = arith.constant 1.280000e+02 : f32
    %106 = vector.broadcast %cst_44 : f32 to vector<8x1xf32>
    %107 = arith.divf %105, %106 : vector<8x1xf32>
    %108 = vector.broadcast %100 : vector<8x1xf32> to vector<8x128xf32>
    %109 = arith.subf %94, %108 : vector<8x128xf32>
    %cst_45 = arith.constant 9.99999974E-6 : f32
    %110 = vector.broadcast %cst_45 : f32 to vector<8x1xf32>
    %111 = arith.addf %107, %110 : vector<8x1xf32>
    %112 = math.rsqrt %111 : vector<8x1xf32>
    %113 = vector.broadcast %112 : vector<8x1xf32> to vector<8x128xf32>
    %114 = arith.mulf %109, %113 : vector<8x128xf32>
    %115 = vector.broadcast %95 : vector<1x128xf32> to vector<8x128xf32>
    %116 = arith.mulf %114, %115 : vector<8x128xf32>
    %117 = vector.broadcast %96 : vector<1x128xf32> to vector<8x128xf32>
    %118 = arith.addf %116, %117 : vector<8x128xf32>
    %119 = vector.shape_cast %118 : vector<8x128xf32> to vector<2x4x128xf32>
    %120 = arith.truncf %119 : vector<2x4x128xf32> to vector<2x4x128xbf16>
    %c0_46 = arith.constant 0 : index
    %c0_47 = arith.constant 0 : index
    %c0_48 = arith.constant 0 : index
    %121 = vector.load %arg12[%c0_46, %c0_47, %c0_48] : memref<2x4x128xbf16, #tpu.memory_space<vmem>>, vector<2x4x128xbf16>
    tpu.vector_store %arg12[%c0_46, %c0_47, %c0_48], %120 {strides = array<i32>} : memref<2x4x128xbf16, #tpu.memory_space<vmem>>, vector<2x4x128xbf16>,
    return
  }
  func.func @transform_0(%arg0: i32) -> (i32, i32, i32) {
    %c0_i32 = arith.constant 0 : i32
    %c0_i32_0 = arith.constant 0 : i32
    %c0_i32_1 = arith.constant 0 : i32
    return %arg0, %c0_i32, %c0_i32_0 : i32, i32, i32
  }
  func.func @transform_1(%arg0: i32) -> (i32, i32, i32) {
    %c0_i32 = arith.constant 0 : i32
    %c0_i32_0 = arith.constant 0 : i32
    %c0_i32_1 = arith.constant 0 : i32
    return %arg0, %c0_i32, %c0_i32_0 : i32, i32, i32
  }
  func.func @transform_2(%arg0: i32) -> (i32, i32) {
    %c0_i32 = arith.constant 0 : i32
    %c0_i32_0 = arith.constant 0 : i32
    %c0_i32_1 = arith.constant 0 : i32
    return %c0_i32, %c0_i32_0 : i32, i32
  }
  func.func @transform_3(%arg0: i32) -> (i32, i32) {
    %c0_i32 = arith.constant 0 : i32
    %c0_i32_0 = arith.constant 0 : i32
    %c0_i32_1 = arith.constant 0 : i32
    return %c0_i32, %c0_i32_0 : i32, i32
  }
  func.func @transform_4(%arg0: i32) -> (i32, i32) {
    %c0_i32 = arith.constant 0 : i32
    %c0_i32_0 = arith.constant 0 : i32
    %c0_i32_1 = arith.constant 0 : i32
    return %c0_i32, %c0_i32_0 : i32, i32
  }
  func.func @transform_5(%arg0: i32) -> (i32, i32) {
    %c0_i32 = arith.constant 0 : i32
    %c0_i32_0 = arith.constant 0 : i32
    %c0_i32_1 = arith.constant 0 : i32
    return %c0_i32, %c0_i32_0 : i32, i32
  }
  func.func @transform_6(%arg0: i32) -> (i32, i32) {
    %c0_i32 = arith.constant 0 : i32
    %c0_i32_0 = arith.constant 0 : i32
    %c0_i32_1 = arith.constant 0 : i32
    return %c0_i32, %c0_i32_0 : i32, i32
  }
  func.func @transform_7(%arg0: i32) -> (i32, i32) {
    %c0_i32 = arith.constant 0 : i32
    %c0_i32_0 = arith.constant 0 : i32
    %c0_i32_1 = arith.constant 0 : i32
    return %c0_i32, %c0_i32_0 : i32, i32
  }
  func.func @transform_8(%arg0: i32) -> (i32, i32) {
    %c0_i32 = arith.constant 0 : i32
    %c0_i32_0 = arith.constant 0 : i32
    %c0_i32_1 = arith.constant 0 : i32
    return %c0_i32, %c0_i32_0 : i32, i32
  }
  func.func @transform_9(%arg0: i32) -> (i32, i32) {
    %c0_i32 = arith.constant 0 : i32
    %c0_i32_0 = arith.constant 0 : i32
    %c0_i32_1 = arith.constant 0 : i32
    return %c0_i32, %c0_i32_0 : i32, i32
  }
  func.func @transform_10(%arg0: i32) -> (i32, i32) {
    %c0_i32 = arith.constant 0 : i32
    %c0_i32_0 = arith.constant 0 : i32
    %c0_i32_1 = arith.constant 0 : i32
    return %c0_i32, %c0_i32_0 : i32, i32
  }
  func.func @transform_11(%arg0: i32) -> (i32, i32, i32) {
    %c0_i32 = arith.constant 0 : i32
    %c0_i32_0 = arith.constant 0 : i32
    %c0_i32_1 = arith.constant 0 : i32
    return %arg0, %c0_i32, %c0_i32_0 : i32, i32, i32
  }
}

</mosaic_0001>

<llo_original>
// kernel: tpu_custom_call.1
$region0: #{tpu_custom_call.1}
  #allocation0 [shape = 'u32[]', space=smem, size = 0x4, offset = 0x4, fixed_abs, tag = 'smem constant byte address 0x4 - core index']
  #allocation1 [shape = 'u32[144,128]{1,0:T(1,128)}', space=vmem, size = 0x12000, scoped, tag = 'internal scratch']
  %s0 = inlined_call_operand.hbm [shape: bf16[4,4,128], index: 0, kind: input, shape index: {}]
  %s1 = inlined_call_operand.hbm [shape: bf16[4,4,128], index: 1, kind: input, shape index: {}]
  %s2 = inlined_call_operand.hbm [shape: bf16[128,384], index: 2, kind: input, shape index: {}]
  %s3 = inlined_call_operand.vmem [shape: f32[1,128], index: 3, kind: input, shape index: {}]
  %s4 = inlined_call_operand.vmem [shape: f32[1,128], index: 4, kind: input, shape index: {}]
  %s5 = inlined_call_operand.hbm [shape: bf16[128,128], index: 5, kind: input, shape index: {}]
  %s6 = inlined_call_operand.vmem [shape: f32[1,128], index: 6, kind: input, shape index: {}]
  %s7 = inlined_call_operand.hbm [shape: bf16[128,128], index: 7, kind: input, shape index: {}]
  %s8 = inlined_call_operand.vmem [shape: f32[1,128], index: 8, kind: input, shape index: {}]
  %s9 = inlined_call_operand.vmem [shape: f32[1,128], index: 9, kind: input, shape index: {}]
  %s10 = inlined_call_operand.vmem [shape: f32[1,128], index: 10, kind: input, shape index: {}]
  %s11 = inlined_call_operand.hbm [shape: bf16[4,4,128], index: 11, kind: output, shape index: {}]
  %s12 = sld [smem:[#allocation0]]
  $region97: #{tpu_custom_call.1} parent=0
    _
  %s14 = ssub.s32 1, %s12
  %s15 = scalar_select 0, %s14, %s12
  $region1: #{tpu_custom_call.1} parent=0
    #allocation2 [shape = 'u8[4096]{0}', space=vmem, size = 0x1000, scoped, tag = 'input window, operand 0']
    #allocation3 [shape = 's32[2]{0}', space=sflag, size = 0x8, scoped, tag = 'scoped memory for tpu_custom_call.1']
    #allocation4 [shape = 's32[2]{0}', space=sflag, size = 0x8, scoped, tag = 'scoped memory for tpu_custom_call.1']
    #allocation5 [shape = 'u8[4096]{0}', space=vmem, size = 0x1000, scoped, tag = 'input window, operand 1']
    #allocation6 [shape = 's32[2]{0}', space=sflag, size = 0x8, scoped, tag = 'scoped memory for tpu_custom_call.1']
    #allocation7 [shape = 'u8[98304]{0}', space=vmem, size = 0x18000, scoped, tag = 'input window, operand 2, single buffered']
    #allocation8 [shape = 'u8[32768]{0}', space=vmem, size = 0x8000, scoped, tag = 'input window, operand 5, single buffered']
    #allocation9 [shape = 's32[1]{0}', space=sflag, size = 0x4, scoped, tag = 'scoped memory for tpu_custom_call.1']
    #allocation10 [shape = 'u8[32768]{0}', space=vmem, size = 0x8000, scoped, tag = 'input window, operand 7, single buffered']
    #allocation11 [shape = 'u8[4096]{0}', space=vmem, size = 0x1000, scoped, tag = 'output window, operand 0']
    %16 = vsyncpa [#allocation3], 0
    %s17 = scalar_lea.sflag [#allocation3], 1
    %18 = vsyncpa %s17, 0
    %19 = vsyncpa [#allocation6], 0
    %s20 = scalar_lea.sflag [#allocation6], 1
    %21 = vsyncpa %s20, 0
    %22 = vsyncpa [#allocation9], 0
    %23 = vsyncpa [#allocation4], 0
    %s24 = scalar_lea.sflag [#allocation4], 1
    %25 = vsyncpa %s24, 0
    loop: start=0, step=1, limit=4
    $region2: #{tpu_custom_call.1} parent=1 // loop_pre_header
      _
    $region3: #{tpu_custom_call.1} parent=1 // loop_header
      %s27 = sphi 0, %s31
      %p28 = scmp.ge.s32.totalorder %s27, 4
      %s37 = sphi 0, %s39
      %s40 = sphi 0, %s37
      %s41 = sphi 0, %s40
      %s57 = sphi 0, %s41
      %s63 = sphi 0, %s65
      %s66 = sphi 0, %s63
      %s67 = sphi 0, %s66
      %s83 = sphi 0, %s67
      %s87 = sphi 0, %s87
      %s89 = sphi 0, %s87
      %s90 = sphi 0, %s89
      %s104 = sphi 0, %s90
      %s108 = sphi 0, %s108
      %s110 = sphi 0, %s108
      %s111 = sphi 0, %s110
      %s125 = sphi 0, %s111
      %s129 = sphi 0, %s129
      %s131 = sphi 0, %s129
      %s132 = sphi 0, %s131
      %s146 = sphi 0, %s132
      %s150 = sphi 0, %s150
      %s152 = sphi 0, %s150
      %s153 = sphi 0, %s152
      %s167 = sphi 0, %s153
      %s171 = sphi 0, %s171
      %s173 = sphi 0, %s171
      %s174 = sphi 0, %s173
      %s188 = sphi 0, %s174
      %s192 = sphi 0, %s192
      %s194 = sphi 0, %s192
      %s195 = sphi 0, %s194
      %s209 = sphi 0, %s195
      %s213 = sphi 0, %s213
      %s215 = sphi 0, %s213
      %s216 = sphi 0, %s215
      %s230 = sphi 0, %s216
      %s234 = sphi 0, %s234
      %s236 = sphi 0, %s234
      %s237 = sphi 0, %s236
      %s251 = sphi 0, %s237
      %s255 = sphi 0, %s255
      %s257 = sphi 0, %s255
      %s258 = sphi 0, %s257
      %s272 = sphi 0, %s258
      %s278 = sphi 0, %s280
      %s281 = sphi 0, %s278
      %s282 = sphi 0, %s281
      %s298 = sphi 0, %s282
    $region4: #{tpu_custom_call.1} parent=1 // loop_header_branch
      %30 = sbr.rel (%p28) target = $region8
    $region5: #{tpu_custom_call.1} parent=1 // loop_body
      %s32 = ssub.s32 %s27, 1
      %s33 = ssub.s32 %s27, 2
      %s34 = sadd.s32 %s27, 1
      %s35 = ssub.s32 %s27, %s34
      %p36 = scmp.eq.s32.totalorder %s35, 0
      %s38 = sadd.s32 %s37, 1
      %s39 = scalar_select %p36, %s37, %s38
      %p42 = pneg %p36
      %p43 = scmp.eq.s32.totalorder %s27, 1
      %p44 = por %p42, %p43
      %p45 = scmp.ne.s32.totalorder %s37, %s40
      %p46 = scmp.eq.s32.totalorder %s27, 0
      %p47 = por %p45, %p46
      %p48 = scmp.ne.s32.totalorder %s37, %s40
      %p49 = scmp.eq.s32.totalorder %s32, 1
      %p50 = por %p48, %p49
      %p51 = scmp.ne.s32.totalorder %s40, %s41
      %p52 = scmp.eq.s32.totalorder %s32, 0
      %p53 = por %p51, %p52
      %p54 = scmp.ne.s32.totalorder %s40, %s41
      %p55 = scmp.eq.s32.totalorder %s33, 1
      %p56 = por %p54, %p55
      %p58 = scmp.ne.s32.totalorder %s41, %s57
      %p59 = scmp.eq.s32.totalorder %s33, 0
      %p60 = por %p58, %p59
      %s61 = ssub.s32 %s27, %s34
      %p62 = scmp.eq.s32.totalorder %s61, 0
      %s64 = sadd.s32 %s63, 1
      %s65 = scalar_select %p62, %s63, %s64
      %p68 = pneg %p62
      %p69 = scmp.eq.s32.totalorder %s27, 1
      %p70 = por %p68, %p69
      %p71 = scmp.ne.s32.totalorder %s63, %s66
      %p72 = scmp.eq.s32.totalorder %s27, 0
      %p73 = por %p71, %p72
      %p74 = scmp.ne.s32.totalorder %s63, %s66
      %p75 = scmp.eq.s32.totalorder %s32, 1
      %p76 = por %p74, %p75
      %p77 = scmp.ne.s32.totalorder %s66, %s67
      %p78 = scmp.eq.s32.totalorder %s32, 0
      %p79 = por %p77, %p78
      %p80 = scmp.ne.s32.totalorder %s66, %s67
      %p81 = scmp.eq.s32.totalorder %s33, 1
      %p82 = por %p80, %p81
      %p84 = scmp.ne.s32.totalorder %s67, %s83
      %p85 = scmp.eq.s32.totalorder %s33, 0
      %p86 = por %p84, %p85
      %s88 = sadd.s32 %s87, 1
      %p91 = scmp.eq.s32.totalorder %s27, 1
      %p92 = scmp.ne.s32.totalorder %s87, %s89
      %p93 = scmp.eq.s32.totalorder %s27, 0
      %p94 = por %p92, %p93
      %p95 = scmp.ne.s32.totalorder %s87, %s89
      %p96 = scmp.eq.s32.totalorder %s32, 1
      %p97 = por %p95, %p96
      %p98 = scmp.ne.s32.totalorder %s89, %s90
      %p99 = scmp.eq.s32.totalorder %s32, 0
      %p100 = por %p98, %p99
      %p101 = scmp.ne.s32.totalorder %s89, %s90
      %p102 = scmp.eq.s32.totalorder %s33, 1
      %p103 = por %p101, %p102
      %p105 = scmp.ne.s32.totalorder %s90, %s104
      %p106 = scmp.eq.s32.totalorder %s33, 0
      %p107 = por %p105, %p106
      %s109 = sadd.s32 %s108, 1
      %p112 = scmp.eq.s32.totalorder %s27, 1
      %p113 = scmp.ne.s32.totalorder %s108, %s110
      %p114 = scmp.eq.s32.totalorder %s27, 0
      %p115 = por %p113, %p114
      %p116 = scmp.ne.s32.totalorder %s108, %s110
      %p117 = scmp.eq.s32.totalorder %s32, 1
      %p118 = por %p116, %p117
      %p119 = scmp.ne.s32.totalorder %s110, %s111
      %p120 = scmp.eq.s32.totalorder %s32, 0
      %p121 = por %p119, %p120
      %p122 = scmp.ne.s32.totalorder %s110, %s111
      %p123 = scmp.eq.s32.totalorder %s33, 1
      %p124 = por %p122, %p123
      %p126 = scmp.ne.s32.totalorder %s111, %s125
      %p127 = scmp.eq.s32.totalorder %s33, 0
      %p128 = por %p126, %p127
      %s130 = sadd.s32 %s129, 1
      %p133 = scmp.eq.s32.totalorder %s27, 1
      %p134 = scmp.ne.s32.totalorder %s129, %s131
      %p135 = scmp.eq.s32.totalorder %s27, 0
      %p136 = por %p134, %p135
      %p137 = scmp.ne.s32.totalorder %s129, %s131
      %p138 = scmp.eq.s32.totalorder %s32, 1
      %p139 = por %p137, %p138
      %p140 = scmp.ne.s32.totalorder %s131, %s132
      %p141 = scmp.eq.s32.totalorder %s32, 0
      %p142 = por %p140, %p141
      %p143 = scmp.ne.s32.totalorder %s131, %s132
      %p144 = scmp.eq.s32.totalorder %s33, 1
      %p145 = por %p143, %p144
      %p147 = scmp.ne.s32.totalorder %s132, %s146
      %p148 = scmp.eq.s32.totalorder %s33, 0
      %p149 = por %p147, %p148
      %s151 = sadd.s32 %s150, 1
      %p154 = scmp.eq.s32.totalorder %s27, 1
      %p155 = scmp.ne.s32.totalorder %s150, %s152
      %p156 = scmp.eq.s32.totalorder %s27, 0
      %p157 = por %p155, %p156
      %p158 = scmp.ne.s32.totalorder %s150, %s152
      %p159 = scmp.eq.s32.totalorder %s32, 1
      %p160 = por %p158, %p159
      %p161 = scmp.ne.s32.totalorder %s152, %s153
      %p162 = scmp.eq.s32.totalorder %s32, 0
      %p163 = por %p161, %p162
      %p164 = scmp.ne.s32.totalorder %s152, %s153
      %p165 = scmp.eq.s32.totalorder %s33, 1
      %p166 = por %p164, %p165
      %p168 = scmp.ne.s32.totalorder %s153, %s167
      %p169 = scmp.eq.s32.totalorder %s33, 0
      %p170 = por %p168, %p169
      %s172 = sadd.s32 %s171, 1
      %p175 = scmp.eq.s32.totalorder %s27, 1
      %p176 = scmp.ne.s32.totalorder %s171, %s173
      %p177 = scmp.eq.s32.totalorder %s27, 0
      %p178 = por %p176, %p177
      %p179 = scmp.ne.s32.totalorder %s171, %s173
      %p180 = scmp.eq.s32.totalorder %s32, 1
      %p181 = por %p179, %p180
      %p182 = scmp.ne.s32.totalorder %s173, %s174
      %p183 = scmp.eq.s32.totalorder %s32, 0
      %p184 = por %p182, %p183
      %p185 = scmp.ne.s32.totalorder %s173, %s174
      %p186 = scmp.eq.s32.totalorder %s33, 1
      %p187 = por %p185, %p186
      %p189 = scmp.ne.s32.totalorder %s174, %s188
      %p190 = scmp.eq.s32.totalorder %s33, 0
      %p191 = por %p189, %p190
      %s193 = sadd.s32 %s192, 1
      %p196 = scmp.eq.s32.totalorder %s27, 1
      %p197 = scmp.ne.s32.totalorder %s192, %s194
      %p198 = scmp.eq.s32.totalorder %s27, 0
      %p199 = por %p197, %p198
      %p200 = scmp.ne.s32.totalorder %s192, %s194
      %p201 = scmp.eq.s32.totalorder %s32, 1
      %p202 = por %p200, %p201
      %p203 = scmp.ne.s32.totalorder %s194, %s195
      %p204 = scmp.eq.s32.totalorder %s32, 0
      %p205 = por %p203, %p204
      %p206 = scmp.ne.s32.totalorder %s194, %s195
      %p207 = scmp.eq.s32.totalorder %s33, 1
      %p208 = por %p206, %p207
      %p210 = scmp.ne.s32.totalorder %s195, %s209
      %p211 = scmp.eq.s32.totalorder %s33, 0
      %p212 = por %p210, %p211
      %s214 = sadd.s32 %s213, 1
      %p217 = scmp.eq.s32.totalorder %s27, 1
      %p218 = scmp.ne.s32.totalorder %s213, %s215
      %p219 = scmp.eq.s32.totalorder %s27, 0
      %p220 = por %p218, %p219
      %p221 = scmp.ne.s32.totalorder %s213, %s215
      %p222 = scmp.eq.s32.totalorder %s32, 1
      %p223 = por %p221, %p222
      %p224 = scmp.ne.s32.totalorder %s215, %s216
      %p225 = scmp.eq.s32.totalorder %s32, 0
      %p226 = por %p224, %p225
      %p227 = scmp.ne.s32.totalorder %s215, %s216
      %p228 = scmp.eq.s32.totalorder %s33, 1
      %p229 = por %p227, %p228
      %p231 = scmp.ne.s32.totalorder %s216, %s230
      %p232 = scmp.eq.s32.totalorder %s33, 0
      %p233 = por %p231, %p232
      %s235 = sadd.s32 %s234, 1
      %p238 = scmp.eq.s32.totalorder %s27, 1
      %p239 = scmp.ne.s32.totalorder %s234, %s236
      %p240 = scmp.eq.s32.totalorder %s27, 0
      %p241 = por %p239, %p240
      %p242 = scmp.ne.s32.totalorder %s234, %s236
      %p243 = scmp.eq.s32.totalorder %s32, 1
      %p244 = por %p242, %p243
      %p245 = scmp.ne.s32.totalorder %s236, %s237
      %p246 = scmp.eq.s32.totalorder %s32, 0
      %p247 = por %p245, %p246
      %p248 = scmp.ne.s32.totalorder %s236, %s237
      %p249 = scmp.eq.s32.totalorder %s33, 1
      %p250 = por %p248, %p249
      %p252 = scmp.ne.s32.totalorder %s237, %s251
      %p253 = scmp.eq.s32.totalorder %s33, 0
      %p254 = por %p252, %p253
      %s256 = sadd.s32 %s255, 1
      %p259 = scmp.eq.s32.totalorder %s27, 1
      %p260 = scmp.ne.s32.totalorder %s255, %s257
      %p261 = scmp.eq.s32.totalorder %s27, 0
      %p262 = por %p260, %p261
      %p263 = scmp.ne.s32.totalorder %s255, %s257
      %p264 = scmp.eq.s32.totalorder %s32, 1
      %p265 = por %p263, %p264
      %p266 = scmp.ne.s32.totalorder %s257, %s258
      %p267 = scmp.eq.s32.totalorder %s32, 0
      %p268 = por %p266, %p267
      %p269 = scmp.ne.s32.totalorder %s257, %s258
      %p270 = scmp.eq.s32.totalorder %s33, 1
      %p271 = por %p269, %p270
      %p273 = scmp.ne.s32.totalorder %s258, %s272
      %p274 = scmp.eq.s32.totalorder %s33, 0
      %p275 = por %p273, %p274
      %s276 = ssub.s32 %s27, %s34
      %p277 = scmp.eq.s32.totalorder %s276, 0
      %s279 = sadd.s32 %s278, 1
      %s280 = scalar_select %p277, %s278, %s279
      %p283 = pneg %p277
      %p284 = scmp.eq.s32.totalorder %s27, 1
      %p285 = por %p283, %p284
      %p286 = scmp.ne.s32.totalorder %s278, %s281
      %p287 = scmp.eq.s32.totalorder %s27, 0
      %p288 = por %p286, %p287
      %p289 = scmp.ne.s32.totalorder %s278, %s281
      %p290 = scmp.eq.s32.totalorder %s32, 1
      %p291 = por %p289, %p290
      %p292 = scmp.ne.s32.totalorder %s281, %s282
      %p293 = scmp.eq.s32.totalorder %s32, 0
      %p294 = por %p292, %p293
      %p295 = scmp.ne.s32.totalorder %s281, %s282
      %p296 = scmp.eq.s32.totalorder %s33, 1
      %p297 = por %p295, %p296
      %p299 = scmp.ne.s32.totalorder %s282, %s298
      %p300 = scmp.eq.s32.totalorder %s33, 0
      %p301 = por %p299, %p300
      %p302 = scmp.le.s32.totalorder 1, %s27
      %p303 = scmp.lt.s32.totalorder %s27, 3
      %p304 = pnand %p302, %p303
      %p305 = pneg %p304
      // Predicated region
      $region9: #{tpu_custom_call.1} parent=5 // pred_check
        _
      $region10: #{tpu_custom_call.1} parent=5 // pred_check_branch
        %307 = sbr.rel (%p304) target = $region12
      $region11: #{tpu_custom_call.1} parent=5 // pred_region
        %s308 = ssub.s32 %s27, 1
        // Predicated region
        $region13: #{tpu_custom_call.1} parent=11 // pred_check
          %p309 = pneg %p100
        $region14: #{tpu_custom_call.1} parent=11 // pred_check_branch
          %311 = sbr.rel (%p309) target = $region16
        $region15: #{tpu_custom_call.1} parent=11 // pred_region
          %s313 = ssub.s32 3072, 3072
          %314 = vsyncadd [#allocation6], %s313
          %s315 = sshll.u32 [#allocation7], 4
          %s316 = int_to_ptr.vmem [resolvable:$true] %s315
          %321 = dma.hbm_to_vmem [thread:$0]  %s2, 3072, %s316, [#allocation6], 192, 192, 12
        $region16: #{tpu_custom_call.1} parent=11 // pred_fallthru
          _
        // Predicated region
        $region17: #{tpu_custom_call.1} parent=11 // pred_check
          %p322 = pneg %p121
        $region18: #{tpu_custom_call.1} parent=11 // pred_check_branch
          %324 = sbr.rel (%p322) target = $region20
        $region19: #{tpu_custom_call.1} parent=11 // pred_region
          _
        $region20: #{tpu_custom_call.1} parent=11 // pred_fallthru
          _
        // Predicated region
        $region21: #{tpu_custom_call.1} parent=11 // pred_check
          %p325 = pneg %p142
        $region22: #{tpu_custom_call.1} parent=11 // pred_check_branch
          %327 = sbr.rel (%p325) target = $region24
        $region23: #{tpu_custom_call.1} parent=11 // pred_region
          _
        $region24: #{tpu_custom_call.1} parent=11 // pred_fallthru
          _
        // Predicated region
        $region25: #{tpu_custom_call.1} parent=11 // pred_check
          %p328 = pneg %p163
        $region26: #{tpu_custom_call.1} parent=11 // pred_check_branch
          %330 = sbr.rel (%p328) target = $region28
        $region27: #{tpu_custom_call.1} parent=11 // pred_region
          %s332 = ssub.s32 1024, 1024
          %333 = vsyncadd [#allocation9], %s332
          %s334 = sshll.u32 [#allocation8], 4
          %s335 = int_to_ptr.vmem [resolvable:$true] %s334
          %340 = dma.hbm_to_vmem [thread:$0]  %s5, 1024, %s335, [#allocation9], 64, 64, 4
        $region28: #{tpu_custom_call.1} parent=11 // pred_fallthru
          _
        // Predicated region
        $region29: #{tpu_custom_call.1} parent=11 // pred_check
          %p341 = pneg %p184
        $region30: #{tpu_custom_call.1} parent=11 // pred_check_branch
          %343 = sbr.rel (%p341) target = $region32
        $region31: #{tpu_custom_call.1} parent=11 // pred_region
          _
        $region32: #{tpu_custom_call.1} parent=11 // pred_fallthru
          _
        // Predicated region
        $region33: #{tpu_custom_call.1} parent=11 // pred_check
          %p344 = pneg %p205
        $region34: #{tpu_custom_call.1} parent=11 // pred_check_branch
          %346 = sbr.rel (%p344) target = $region36
        $region35: #{tpu_custom_call.1} parent=11 // pred_region
          %s348 = ssub.s32 1024, 1024
          %349 = vsyncadd [#allocation9], %s348
          %s350 = sshll.u32 [#allocation10], 4
          %s351 = int_to_ptr.vmem [resolvable:$true] %s350
          %356 = dma.hbm_to_vmem [thread:$0]  %s7, 1024, %s351, [#allocation9], 64, 64, 4
        $region36: #{tpu_custom_call.1} parent=11 // pred_fallthru
          _
        // Predicated region
        $region37: #{tpu_custom_call.1} parent=11 // pred_check
          %p357 = pneg %p226
        $region38: #{tpu_custom_call.1} parent=11 // pred_check_branch
          %359 = sbr.rel (%p357) target = $region40
        $region39: #{tpu_custom_call.1} parent=11 // pred_region
          _
        $region40: #{tpu_custom_call.1} parent=11 // pred_fallthru
          _
        // Predicated region
        $region41: #{tpu_custom_call.1} parent=11 // pred_check
          %p360 = pneg %p247
        $region42: #{tpu_custom_call.1} parent=11 // pred_check_branch
          %362 = sbr.rel (%p360) target = $region44
        $region43: #{tpu_custom_call.1} parent=11 // pred_region
          _
        $region44: #{tpu_custom_call.1} parent=11 // pred_fallthru
          _
        // Predicated region
        $region45: #{tpu_custom_call.1} parent=11 // pred_check
          %p363 = pneg %p268
        $region46: #{tpu_custom_call.1} parent=11 // pred_check_branch
          %365 = sbr.rel (%p363) target = $region48
        $region47: #{tpu_custom_call.1} parent=11 // pred_region
          _
        $region48: #{tpu_custom_call.1} parent=11 // pred_fallthru
          _
      $region12: #{tpu_custom_call.1} parent=5 // pred_fallthru
        _
      %p366 = scmp.lt.s32.totalorder %s27, 2
      // Predicated region
      $region49: #{tpu_custom_call.1} parent=5 // pred_check
        %p367 = pneg %p366
      $region50: #{tpu_custom_call.1} parent=5 // pred_check_branch
        %369 = sbr.rel (%p367) target = $region52
      $region51: #{tpu_custom_call.1} parent=5 // pred_region
        // Predicated region
        $region53: #{tpu_custom_call.1} parent=51 // pred_check
          %p370 = pneg %p47
        $region54: #{tpu_custom_call.1} parent=51 // pred_check_branch
          %372 = sbr.rel (%p370) target = $region56
        $region55: #{tpu_custom_call.1} parent=51 // pred_region
          %s373 = sand.u32 %s37, 1
          %s374 = scalar_lea.sflag [#allocation3], %s373
          %s375 = sand.u32 %s37, 1
          %s376 = smul.addr %s375, 4
          %s377 = scalar_lea.vmem [#allocation2], %s376
          %s378 = smul.u32 2, %s27
          %s380 = ssub.s32 64, 64
          %381 = vsyncadd %s374, %s380
          %s382 = smul.addr %s378, 32
          %s383 = scalar_lea.hbm %s0, %s382
          %s384 = sshll.u32 %s377, 4
          %s385 = int_to_ptr.vmem [resolvable:$true] %s384
          %390 = dma.hbm_to_vmem [thread:$0]  %s383, 64, %s385, %s374, 32, 32, 2
        $region56: #{tpu_custom_call.1} parent=51 // pred_fallthru
          _
        // Predicated region
        $region57: #{tpu_custom_call.1} parent=51 // pred_check
          %p391 = pneg %p73
        $region58: #{tpu_custom_call.1} parent=51 // pred_check_branch
          %393 = sbr.rel (%p391) target = $region60
        $region59: #{tpu_custom_call.1} parent=51 // pred_region
          %s394 = sand.u32 %s27, 1
          %s395 = scalar_lea.sflag [#allocation6], %s394
          %s396 = sand.u32 %s63, 1
          %s397 = smul.addr %s396, 4
          %s398 = scalar_lea.vmem [#allocation5], %s397
          %s399 = smul.u32 2, %s27
          %s401 = ssub.s32 64, 64
          %402 = vsyncadd %s395, %s401
          %s403 = smul.addr %s399, 32
          %s404 = scalar_lea.hbm %s1, %s403
          %s405 = sshll.u32 %s398, 4
          %s406 = int_to_ptr.vmem [resolvable:$true] %s405
          %411 = dma.hbm_to_vmem [thread:$0]  %s404, 64, %s406, %s395, 32, 32, 2
        $region60: #{tpu_custom_call.1} parent=51 // pred_fallthru
          _
      $region52: #{tpu_custom_call.1} parent=5 // pred_fallthru
        _
      %p412 = scmp.le.s32.totalorder 1, %s27
      %p413 = scmp.lt.s32.totalorder %s27, 3
      %p414 = pnand %p412, %p413
      %p415 = pneg %p414
      // Predicated region
      $region61: #{tpu_custom_call.1} parent=5 // pred_check
        _
      $region62: #{tpu_custom_call.1} parent=5 // pred_check_branch
        %417 = sbr.rel (%p414) target = $region64
      $region63: #{tpu_custom_call.1} parent=5 // pred_region
        %s418 = ssub.s32 %s27, 1
        %s419 = sand.u32 %s40, 1
        %s420 = scalar_lea.sflag [#allocation3], %s419
        %s421 = sand.u32 %s40, 1
        %s422 = smul.addr %s421, 4
        %s423 = scalar_lea.vmem [#allocation2], %s422
        // Predicated region
        $region65: #{tpu_custom_call.1} parent=63 // pred_check
          %p424 = pneg %p53
        $region66: #{tpu_custom_call.1} parent=63 // pred_check_branch
          %426 = sbr.rel (%p424) target = $region68
        $region67: #{tpu_custom_call.1} parent=63 // pred_region
          %427 = dma.done %s420, 64
        $region68: #{tpu_custom_call.1} parent=63 // pred_fallthru
          _
        %s428 = sand.u32 %s32, 1
        %s429 = scalar_lea.sflag [#allocation6], %s428
        %s430 = sand.u32 %s66, 1
        %s431 = smul.addr %s430, 4
        %s432 = scalar_lea.vmem [#allocation5], %s431
        // Predicated region
        $region69: #{tpu_custom_call.1} parent=63 // pred_check
          %p433 = pneg %p79
        $region70: #{tpu_custom_call.1} parent=63 // pred_check_branch
          %435 = sbr.rel (%p433) target = $region72
        $region71: #{tpu_custom_call.1} parent=63 // pred_region
          %436 = dma.done %s429, 64
        $region72: #{tpu_custom_call.1} parent=63 // pred_fallthru
          _
        // Predicated region
        $region73: #{tpu_custom_call.1} parent=63 // pred_check
          %p437 = pneg %p100
        $region74: #{tpu_custom_call.1} parent=63 // pred_check_branch
          %439 = sbr.rel (%p437) target = $region76
        $region75: #{tpu_custom_call.1} parent=63 // pred_region
          %440 = dma.done [#allocation6], 3072
        $region76: #{tpu_custom_call.1} parent=63 // pred_fallthru
          _
        // Predicated region
        $region77: #{tpu_custom_call.1} parent=63 // pred_check
          %p441 = pneg %p163
        $region78: #{tpu_custom_call.1} parent=63 // pred_check_branch
          %443 = sbr.rel (%p441) target = $region80
        $region79: #{tpu_custom_call.1} parent=63 // pred_region
          %444 = dma.done [#allocation9], 1024
        $region80: #{tpu_custom_call.1} parent=63 // pred_fallthru
          _
        // Predicated region
        $region81: #{tpu_custom_call.1} parent=63 // pred_check
          %p445 = pneg %p205
        $region82: #{tpu_custom_call.1} parent=63 // pred_check_branch
          %447 = sbr.rel (%p445) target = $region84
        $region83: #{tpu_custom_call.1} parent=63 // pred_region
          %448 = dma.done [#allocation9], 1024
        $region84: #{tpu_custom_call.1} parent=63 // pred_fallthru
          _
        %s449 = sand.u32 %s40, 1
        %s450 = scalar_lea.sflag [#allocation3], %s449
        %s451 = sand.u32 %s40, 1
        %s452 = smul.addr %s451, 4
        %s453 = scalar_lea.vmem [#allocation2], %s452
        %p454 = pneg %p53
        %p455 = pneg %p50
        %s456 = sand.u32 %s32, 1
        %s457 = scalar_lea.sflag [#allocation6], %s456
        %s458 = sand.u32 %s66, 1
        %s459 = smul.addr %s458, 4
        %s460 = scalar_lea.vmem [#allocation5], %s459
        %p461 = pneg %p79
        %p462 = pneg %p76
        %p463 = pneg %p100
        %p464 = pneg %p97
        %p465 = pneg %p121
        %p466 = pneg %p118
        %p467 = pneg %p142
        %p468 = pneg %p139
        %p469 = pneg %p163
        %p470 = pneg %p160
        %p471 = pneg %p184
        %p472 = pneg %p181
        %p473 = pneg %p205
        %p474 = pneg %p202
        %p475 = pneg %p226
        %p476 = pneg %p223
        %p477 = pneg %p247
        %p478 = pneg %p244
        %p479 = pneg %p268
        %p480 = pneg %p265
        %p481 = pneg %p294
        %p482 = pneg %p291
        %s483 = sand.u32 %s281, 1
        %s484 = scalar_lea.sflag [#allocation4], %s483
        %s485 = sand.u32 %s281, 1
        %s486 = smul.addr %s485, 4
        %s487 = scalar_lea.vmem [#allocation11], %s486
        %s488 = smul.u32 2, %s32
        %s489 = smul.u32 2, %s32
        %s490 = smul.u32 2, %s32
        %v492 = vld [vmem:[%s423] sm:$0x3]
        %v493 = vld [vmem:[%s423 + $0x2] sm:$0x3]
        %v494 = vld [vmem:[%s432] sm:$0x3]
        %v495 = vld [vmem:[%s432 + $0x2] sm:$0x3]
        %v496 = vld [vmem:[#allocation7] sm:$0xff]
        %v497 = vld [vmem:[#allocation7 + $0x8] sm:$0xf]
        %v498 = vld [vmem:[#allocation7 + $0xc] sm:$0xff]
        %v499 = vld [vmem:[#allocation7 + $0x14] sm:$0xf]
        %v500 = vld [vmem:[#allocation7 + $0x18] sm:$0xff]
        %v501 = vld [vmem:[#allocation7 + $0x20] sm:$0xf]
        %v502 = vld [vmem:[#allocation7 + $0x24] sm:$0xff]
        %v503 = vld [vmem:[#allocation7 + $0x2c] sm:$0xf]
        %v504 = vld [vmem:[#allocation7 + $0x30] sm:$0xff]
        %v505 = vld [vmem:[#allocation7 + $0x38] sm:$0xf]
        %v506 = vld [vmem:[#allocation7 + $0x3c] sm:$0xff]
        %v507 = vld [vmem:[#allocation7 + $0x44] sm:$0xf]
        %v508 = vld [vmem:[#allocation7 + $0x48] sm:$0xff]
        %v509 = vld [vmem:[#allocation7 + $0x50] sm:$0xf]
        %v510 = vld [vmem:[#allocation7 + $0x54] sm:$0xff]
        %v511 = vld [vmem:[#allocation7 + $0x5c] sm:$0xf]
        %v512 = vld [vmem:[#allocation7 + $0x60] sm:$0xff]
        %v513 = vld [vmem:[#allocation7 + $0x68] sm:$0xf]
        %v514 = vld [vmem:[#allocation7 + $0x6c] sm:$0xff]
        %v515 = vld [vmem:[#allocation7 + $0x74] sm:$0xf]
        %v516 = vld [vmem:[#allocation7 + $0x78] sm:$0xff]
        %v517 = vld [vmem:[#allocation7 + $0x80] sm:$0xf]
        %v518 = vld [vmem:[#allocation7 + $0x84] sm:$0xff]
        %v519 = vld [vmem:[#allocation7 + $0x8c] sm:$0xf]
        %v520 = vld [vmem:[#allocation7 + $0x90] sm:$0xff]
        %v521 = vld [vmem:[#allocation7 + $0x98] sm:$0xf]
        %v522 = vld [vmem:[#allocation7 + $0x9c] sm:$0xff]
        %v523 = vld [vmem:[#allocation7 + $0xa4] sm:$0xf]
        %v524 = vld [vmem:[#allocation7 + $0xa8] sm:$0xff]
        %v525 = vld [vmem:[#allocation7 + $0xb0] sm:$0xf]
        %v526 = vld [vmem:[#allocation7 + $0xb4] sm:$0xff]
        %v527 = vld [vmem:[#allocation7 + $0xbc] sm:$0xf]
        %v530 = vcombine.low %v492, %v493
        %v532 = vunpack.c.l.s4 1983009808
        %v533 = vunpack.c.0.s8 %v532
        %v534 = vlaneseq
        %v535 = vshrl.u32 %v534, 7
        %v536 = vsub.s32 %v533, %v535
        %v537 = vrot.slane %v530, %v536
        %v571 = vunpack.c.l.b16 %v496
        %v572 = vunpack.c.h.b16 %v496
        %v573 = vunpack.c.l.b16 %v497
        %v574 = vunpack.c.l.b16 %v498
        %v575 = vunpack.c.h.b16 %v498
        %v576 = vunpack.c.l.b16 %v499
        %v577 = vunpack.c.l.b16 %v500
        %v578 = vunpack.c.h.b16 %v500
        %v579 = vunpack.c.l.b16 %v501
        %v580 = vunpack.c.l.b16 %v502
        %v581 = vunpack.c.h.b16 %v502
        %v582 = vunpack.c.l.b16 %v503
        %v583 = vunpack.c.l.b16 %v504
        %v584 = vunpack.c.h.b16 %v504
        %v585 = vunpack.c.l.b16 %v505
        %v586 = vunpack.c.l.b16 %v506
        %v587 = vunpack.c.h.b16 %v506
        %v588 = vunpack.c.l.b16 %v507
        %v589 = vunpack.c.l.b16 %v508
        %v590 = vunpack.c.h.b16 %v508
        %v591 = vunpack.c.l.b16 %v509
        %v592 = vunpack.c.l.b16 %v510
        %v593 = vunpack.c.h.b16 %v510
        %v594 = vunpack.c.l.b16 %v511
        %v595 = vunpack.c.l.b16 %v512
        %v596 = vunpack.c.h.b16 %v512
        %v597 = vunpack.c.l.b16 %v513
        %v598 = vunpack.c.l.b16 %v514
        %v599 = vunpack.c.h.b16 %v514
        %v600 = vunpack.c.l.b16 %v515
        %v601 = vunpack.c.l.b16 %v516
        %v602 = vunpack.c.h.b16 %v516
        %v603 = vunpack.c.l.b16 %v517
        %v604 = vunpack.c.l.b16 %v518
        %v605 = vunpack.c.h.b16 %v518
        %v606 = vunpack.c.l.b16 %v519
        %v607 = vunpack.c.l.b16 %v520
        %v608 = vunpack.c.h.b16 %v520
        %v609 = vunpack.c.l.b16 %v521
        %v610 = vunpack.c.l.b16 %v522
        %v611 = vunpack.c.h.b16 %v522
        %v612 = vunpack.c.l.b16 %v523
        %v613 = vunpack.c.l.b16 %v524
        %v614 = vunpack.c.h.b16 %v524
        %v615 = vunpack.c.l.b16 %v525
        %v616 = vunpack.c.l.b16 %v526
        %v617 = vunpack.c.h.b16 %v526
        %v618 = vunpack.c.l.b16 %v527
        %v619 = vpack.c.b16 %v574, %v571
        %v620 = vpack.c.b16 %v575, %v572
        %v621 = vpack.c.b16 %v576, %v573
        %v622 = vpack.c.b16 %v580, %v577
        %v623 = vpack.c.b16 %v581, %v578
        %v624 = vpack.c.b16 %v582, %v579
        %v625 = vpack.c.b16 %v586, %v583
        %v626 = vpack.c.b16 %v587, %v584
        %v627 = vpack.c.b16 %v588, %v585
        %v628 = vpack.c.b16 %v592, %v589
        %v629 = vpack.c.b16 %v593, %v590
        %v630 = vpack.c.b16 %v594, %v591
        %v631 = vpack.c.b16 %v598, %v595
        %v632 = vpack.c.b16 %v599, %v596
        %v633 = vpack.c.b16 %v600, %v597
        %v634 = vpack.c.b16 %v604, %v601
        %v635 = vpack.c.b16 %v605, %v602
        %v636 = vpack.c.b16 %v606, %v603
        %v637 = vpack.c.b16 %v610, %v607
        %v638 = vpack.c.b16 %v611, %v608
        %v639 = vpack.c.b16 %v612, %v609
        %v640 = vpack.c.b16 %v616, %v613
        %v641 = vpack.c.b16 %v617, %v614
        %v642 = vpack.c.b16 %v618, %v615
        %667 = vmatprep.subr.bf16.mxu0 %v641
        %668 = vmatpush1.bf16.msra.mxu0 %v640
        %669 = vmatprep.subr.bf16.mxu0 %v638
        %670 = vmatpush1.bf16.msra.mxu0 %v637
        %671 = vmatprep.subr.bf16.mxu0 %v635
        %672 = vmatpush1.bf16.msra.mxu0 %v634
        %673 = vmatprep.subr.bf16.mxu0 %v632
        %674 = vmatpush1.bf16.msra.mxu0 %v631
        %675 = vmatprep.subr.bf16.mxu0 %v629
        %676 = vmatpush1.bf16.msra.mxu0 %v628
        %677 = vmatprep.subr.bf16.mxu0 %v626
        %678 = vmatpush1.bf16.msra.mxu0 %v625
        %679 = vmatprep.subr.bf16.mxu0 %v623
        %680 = vmatpush1.bf16.msra.mxu0 %v622
        %681 = vmatprep.subr.bf16.mxu0 %v620
        %682 = vmatpush1.bf16.msra.mxu0 %v619
        %683 = vmatprep.subr.bf16.mxu0 0
        %684 = vmatpush2.bf16.msra.mxu0 0
        %685 = vmatprep.subr.bf16.mxu0 0
        %686 = vmatpush2.bf16.msra.mxu0 0
        %687 = vmatprep.subr.bf16.mxu0 0
        %688 = vmatpush2.bf16.msra.mxu0 0
        %689 = vmatprep.subr.bf16.mxu0 0
        %690 = vmatpush2.bf16.msra.mxu0 0
        %691 = vmatprep.subr.bf16.mxu0 0
        %692 = vmatpush2.bf16.msra.mxu0 0
        %693 = vmatprep.subr.bf16.mxu0 0
        %694 = vmatpush2.bf16.msra.mxu0 0
        %695 = vmatprep.subr.bf16.mxu0 0
        %696 = vmatpush2.bf16.msra.mxu0 0
        %697 = vmatprep.subr.bf16.mxu0 0
        %698 = vmatpush2.bf16.msra.mxu0 0
        %699 = vmatprep.mubr.bf16.mxu0 0
        %700 = vmatmul.mubr.bf16.gmra.mxu0 %v537
        %v701 = vpop.f32.mrf.mxu0
        %v702 = vadd.f32 0.0, %v701
        %v703 = vpop.f32.mrf.mxu0
        %v704 = vadd.f32 0.0, %v703
        %v705 = vpop.f32.mrf.mxu0
        %v706 = vpop.f32.mrf.mxu0
        %707 = vdwg.mxu0
        %708 = vmatprep.subr.bf16.mxu0 0
        %709 = vmatpush1.bf16.msra.mxu0 %v642
        %710 = vmatprep.subr.bf16.mxu0 0
        %711 = vmatpush1.bf16.msra.mxu0 %v639
        %712 = vmatprep.subr.bf16.mxu0 0
        %713 = vmatpush1.bf16.msra.mxu0 %v636
        %714 = vmatprep.subr.bf16.mxu0 0
        %715 = vmatpush1.bf16.msra.mxu0 %v633
        %716 = vmatprep.subr.bf16.mxu0 0
        %717 = vmatpush1.bf16.msra.mxu0 %v630
        %718 = vmatprep.subr.bf16.mxu0 0
        %719 = vmatpush1.bf16.msra.mxu0 %v627
        %720 = vmatprep.subr.bf16.mxu0 0
        %721 = vmatpush1.bf16.msra.mxu0 %v624
        %722 = vmatprep.subr.bf16.mxu0 0
        %723 = vmatpush1.bf16.msra.mxu0 %v621
        %724 = vmatprep.subr.bf16.mxu0 0
        %725 = vmatpush2.bf16.msra.mxu0 0
        %726 = vmatprep.subr.bf16.mxu0 0
        %727 = vmatpush2.bf16.msra.mxu0 0
        %728 = vmatprep.subr.bf16.mxu0 0
        %729 = vmatpush2.bf16.msra.mxu0 0
        %730 = vmatprep.subr.bf16.mxu0 0
        %731 = vmatpush2.bf16.msra.mxu0 0
        %732 = vmatprep.subr.bf16.mxu0 0
        %733 = vmatpush2.bf16.msra.mxu0 0
        %734 = vmatprep.subr.bf16.mxu0 0
        %735 = vmatpush2.bf16.msra.mxu0 0
        %736 = vmatprep.subr.bf16.mxu0 0
        %737 = vmatpush2.bf16.msra.mxu0 0
        %738 = vmatprep.subr.bf16.mxu0 0
        %739 = vmatpush2.bf16.msra.mxu0 0
        %740 = vmatprep.mubr.bf16.mxu0 0
        %741 = vmatmul.mubr.bf16.gmra.mxu0 %v537
        %v742 = vpop.f32.mrf.mxu0
        %v743 = vadd.f32 0.0, %v742
        %v744 = vpop.f32.mrf.mxu0
        %v745 = vpop.f32.mrf.mxu0
        %v746 = vpop.f32.mrf.mxu0
        %747 = vdwg.mxu0
        %v750 = vcombine.low %v494, %v495
        %v752 = vunpack.c.l.s4 1983009808
        %v753 = vunpack.c.0.s8 %v752
        %v754 = vlaneseq
        %v755 = vshrl.u32 %v754, 7
        %v756 = vsub.s32 %v753, %v755
        %v757 = vrot.slane %v750, %v756
        %759 = vmatprep.subr.bf16.mxu0 %v642
        %760 = vmatpush1.bf16.msra.mxu0 %v641
        %761 = vmatprep.subr.bf16.mxu0 %v639
        %762 = vmatpush1.bf16.msra.mxu0 %v638
        %763 = vmatprep.subr.bf16.mxu0 %v636
        %764 = vmatpush1.bf16.msra.mxu0 %v635
        %765 = vmatprep.subr.bf16.mxu0 %v633
        %766 = vmatpush1.bf16.msra.mxu0 %v632
        %767 = vmatprep.subr.bf16.mxu0 %v630
        %768 = vmatpush1.bf16.msra.mxu0 %v629
        %769 = vmatprep.subr.bf16.mxu0 %v627
        %770 = vmatpush1.bf16.msra.mxu0 %v626
        %771 = vmatprep.subr.bf16.mxu0 %v624
        %772 = vmatpush1.bf16.msra.mxu0 %v623
        %773 = vmatprep.subr.bf16.mxu0 %v621
        %774 = vmatpush1.bf16.msra.mxu0 %v620
        %775 = vmatprep.subr.bf16.mxu0 0
        %776 = vmatpush2.bf16.msra.mxu0 0
        %777 = vmatprep.subr.bf16.mxu0 0
        %778 = vmatpush2.bf16.msra.mxu0 0
        %779 = vmatprep.subr.bf16.mxu0 0
        %780 = vmatpush2.bf16.msra.mxu0 0
        %781 = vmatprep.subr.bf16.mxu0 0
        %782 = vmatpush2.bf16.msra.mxu0 0
        %783 = vmatprep.subr.bf16.mxu0 0
        %784 = vmatpush2.bf16.msra.mxu0 0
        %785 = vmatprep.subr.bf16.mxu0 0
        %786 = vmatpush2.bf16.msra.mxu0 0
        %787 = vmatprep.subr.bf16.mxu0 0
        %788 = vmatpush2.bf16.msra.mxu0 0
        %789 = vmatprep.subr.bf16.mxu0 0
        %790 = vmatpush2.bf16.msra.mxu0 0
        %791 = vmatprep.mubr.bf16.mxu0 0
        %792 = vmatmul.mubr.bf16.gmra.mxu0 %v757
        %v793 = vpop.f32.mrf.mxu0
        %v794 = vadd.f32 0.0, %v793
        %v795 = vpop.f32.mrf.mxu0
        %v796 = vadd.f32 0.0, %v795
        %v797 = vpop.f32.mrf.mxu0
        %v798 = vpop.f32.mrf.mxu0
        %799 = vdwg.mxu0
        %v800 = vpack.c.bf16 %v702, %v702
        %v803 = vunpack.c.l.s4 1983009808
        %v804 = vunpack.c.0.s8 %v803
        %v805 = vlaneseq
        %v806 = vshrl.u32 %v805, 7
        %v807 = vsub.s32 %v804, %v806
        %v808 = vrot.slane %v800, %v807
        %v809 = vcombine.high %v808, %v808
        %v812 = vpack.c.bf16 %v704, %v704
        %v815 = vunpack.c.l.s4 1983009808
        %v816 = vunpack.c.0.s8 %v815
        %v817 = vlaneseq
        %v818 = vshrl.u32 %v817, 7
        %v819 = vsub.s32 %v816, %v818
        %v820 = vrot.slane %v812, %v819
        %v821 = vcombine.high %v820, %v820
        %v824 = vpack.c.bf16 %v743, %v743
        %v827 = vunpack.c.l.s4 1983009808
        %v828 = vunpack.c.0.s8 %v827
        %v829 = vlaneseq
        %v830 = vshrl.u32 %v829, 7
        %v831 = vsub.s32 %v828, %v830
        %v832 = vrot.slane %v824, %v831
        %v833 = vcombine.high %v832, %v832
        %v834 = vpack.c.bf16 %v794, %v794
        %v837 = vunpack.c.l.s4 1983009808
        %v838 = vunpack.c.0.s8 %v837
        %v839 = vlaneseq
        %v840 = vshrl.u32 %v839, 7
        %v841 = vsub.s32 %v838, %v840
        %v842 = vrot.slane %v834, %v841
        %v843 = vcombine.high %v842, %v842
        %v846 = vpack.c.bf16 %v796, %v796
        %v849 = vunpack.c.l.s4 1983009808
        %v850 = vunpack.c.0.s8 %v849
        %v851 = vlaneseq
        %v852 = vshrl.u32 %v851, 7
        %v853 = vsub.s32 %v850, %v852
        %v854 = vrot.slane %v846, %v853
        %v855 = vcombine.high %v854, %v854
        %856 = vmatprep.subr.bf16.mxu0 0
        %857 = vmatpush1.bf16.xpose.msra.mxu0 0
        %858 = vmatprep.subr.bf16.mxu0 0
        %859 = vmatpush1.bf16.xpose.msra.mxu0 0
        %860 = vmatprep.subr.bf16.mxu0 0
        %861 = vmatpush1.bf16.xpose.msra.mxu0 0
        %862 = vmatprep.subr.bf16.mxu0 0
        %863 = vmatpush1.bf16.xpose.msra.mxu0 0
        %864 = vmatprep.subr.bf16.mxu0 0
        %865 = vmatpush1.bf16.xpose.msra.mxu0 0
        %866 = vmatprep.subr.bf16.mxu0 0
        %867 = vmatpush1.bf16.xpose.msra.mxu0 0
        %868 = vmatprep.subr.bf16.mxu0 0
        %869 = vmatpush1.bf16.xpose.msra.mxu0 0
        %870 = vmatprep.subr.bf16.mxu0 0
        %871 = vmatpush1.bf16.xpose.msra.mxu0 %v820
        %872 = vmatprep.subr.bf16.mxu0 0
        %873 = vmatpush2.bf16.xpose.msra.mxu0 0
        %874 = vmatprep.subr.bf16.mxu0 0
        %875 = vmatpush2.bf16.xpose.msra.mxu0 0
        %876 = vmatprep.subr.bf16.mxu0 0
        %877 = vmatpush2.bf16.xpose.msra.mxu0 0
        %878 = vmatprep.subr.bf16.mxu0 0
        %879 = vmatpush2.bf16.xpose.msra.mxu0 0
        %880 = vmatprep.subr.bf16.mxu0 0
        %881 = vmatpush2.bf16.xpose.msra.mxu0 0
        %882 = vmatprep.subr.bf16.mxu0 0
        %883 = vmatpush2.bf16.xpose.msra.mxu0 0
        %884 = vmatprep.subr.bf16.mxu0 0
        %885 = vmatpush2.bf16.xpose.msra.mxu0 0
        %886 = vmatprep.subr.bf16.mxu0 0
        %887 = vmatpush2.bf16.xpose.msra.mxu0 0
        %888 = vmatprep.mubr.bf16.mxu0 0
        %889 = vmatmul.mubr.bf16.gmra.mxu0 %v808
        %v890 = vpop.f32.mrf.mxu0
        %v891 = vadd.f32 0.0, %v890
        %v892 = vpop.f32.mrf.mxu0
        %v893 = vpop.f32.mrf.mxu0
        %v894 = vpop.f32.mrf.mxu0
        %895 = vdwg.mxu0
        %896 = vmatprep.subr.bf16.mxu0 0
        %897 = vmatpush1.bf16.xpose.msra.mxu0 0
        %898 = vmatprep.subr.bf16.mxu0 0
        %899 = vmatpush1.bf16.xpose.msra.mxu0 0
        %900 = vmatprep.subr.bf16.mxu0 0
        %901 = vmatpush1.bf16.xpose.msra.mxu0 0
        %902 = vmatprep.subr.bf16.mxu0 0
        %903 = vmatpush1.bf16.xpose.msra.mxu0 0
        %904 = vmatprep.subr.bf16.mxu0 0
        %905 = vmatpush1.bf16.xpose.msra.mxu0 0
        %906 = vmatprep.subr.bf16.mxu0 0
        %907 = vmatpush1.bf16.xpose.msra.mxu0 0
        %908 = vmatprep.subr.bf16.mxu0 0
        %909 = vmatpush1.bf16.xpose.msra.mxu0 0
        %910 = vmatprep.subr.bf16.mxu0 0
        %911 = vmatpush1.bf16.xpose.msra.mxu0 %v821
        %912 = vmatprep.subr.bf16.mxu0 0
        %913 = vmatpush2.bf16.xpose.msra.mxu0 0
        %914 = vmatprep.subr.bf16.mxu0 0
        %915 = vmatpush2.bf16.xpose.msra.mxu0 0
        %916 = vmatprep.subr.bf16.mxu0 0
        %917 = vmatpush2.bf16.xpose.msra.mxu0 0
        %918 = vmatprep.subr.bf16.mxu0 0
        %919 = vmatpush2.bf16.xpose.msra.mxu0 0
        %920 = vmatprep.subr.bf16.mxu0 0
        %921 = vmatpush2.bf16.xpose.msra.mxu0 0
        %922 = vmatprep.subr.bf16.mxu0 0
        %923 = vmatpush2.bf16.xpose.msra.mxu0 0
        %924 = vmatprep.subr.bf16.mxu0 0
        %925 = vmatpush2.bf16.xpose.msra.mxu0 0
        %926 = vmatprep.subr.bf16.mxu0 0
        %927 = vmatpush2.bf16.xpose.msra.mxu0 0
        %928 = vmatprep.mubr.bf16.mxu0 0
        %929 = vmatmul.mubr.bf16.gmra.mxu0 %v809
        %v930 = vpop.f32.mrf.mxu0
        %v931 = vadd.f32 0.0, %v930
        %v932 = vpop.f32.mrf.mxu0
        %v933 = vpop.f32.mrf.mxu0
        %v934 = vpop.f32.mrf.mxu0
        %935 = vdwg.mxu0
        %936 = vmatprep.subr.bf16.mxu0 0
        %937 = vmatpush1.bf16.xpose.msra.mxu0 0
        %938 = vmatprep.subr.bf16.mxu0 0
        %939 = vmatpush1.bf16.xpose.msra.mxu0 0
        %940 = vmatprep.subr.bf16.mxu0 0
        %941 = vmatpush1.bf16.xpose.msra.mxu0 0
        %942 = vmatprep.subr.bf16.mxu0 0
        %943 = vmatpush1.bf16.xpose.msra.mxu0 0
        %944 = vmatprep.subr.bf16.mxu0 0
        %945 = vmatpush1.bf16.xpose.msra.mxu0 0
        %946 = vmatprep.subr.bf16.mxu0 0
        %947 = vmatpush1.bf16.xpose.msra.mxu0 0
        %948 = vmatprep.subr.bf16.mxu0 0
        %949 = vmatpush1.bf16.xpose.msra.mxu0 0
        %950 = vmatprep.subr.bf16.mxu0 0
        %951 = vmatpush1.bf16.xpose.msra.mxu0 %v842
        %952 = vmatprep.subr.bf16.mxu0 0
        %953 = vmatpush2.bf16.xpose.msra.mxu0 0
        %954 = vmatprep.subr.bf16.mxu0 0
        %955 = vmatpush2.bf16.xpose.msra.mxu0 0
        %956 = vmatprep.subr.bf16.mxu0 0
        %957 = vmatpush2.bf16.xpose.msra.mxu0 0
        %958 = vmatprep.subr.bf16.mxu0 0
        %959 = vmatpush2.bf16.xpose.msra.mxu0 0
        %960 = vmatprep.subr.bf16.mxu0 0
        %961 = vmatpush2.bf16.xpose.msra.mxu0 0
        %962 = vmatprep.subr.bf16.mxu0 0
        %963 = vmatpush2.bf16.xpose.msra.mxu0 0
        %964 = vmatprep.subr.bf16.mxu0 0
        %965 = vmatpush2.bf16.xpose.msra.mxu0 0
        %966 = vmatprep.subr.bf16.mxu0 0
        %967 = vmatpush2.bf16.xpose.msra.mxu0 0
        %968 = vmatprep.mubr.bf16.mxu0 0
        %969 = vmatmul.mubr.bf16.gmra.mxu0 %v808
        %v970 = vpop.f32.mrf.mxu0
        %v971 = vadd.f32 0.0, %v970
        %v972 = vpop.f32.mrf.mxu0
        %v973 = vpop.f32.mrf.mxu0
        %v974 = vpop.f32.mrf.mxu0
        %975 = vdwg.mxu0
        %976 = vmatprep.subr.bf16.mxu0 0
        %977 = vmatpush1.bf16.xpose.msra.mxu0 0
        %978 = vmatprep.subr.bf16.mxu0 0
        %979 = vmatpush1.bf16.xpose.msra.mxu0 0
        %980 = vmatprep.subr.bf16.mxu0 0
        %981 = vmatpush1.bf16.xpose.msra.mxu0 0
        %982 = vmatprep.subr.bf16.mxu0 0
        %983 = vmatpush1.bf16.xpose.msra.mxu0 0
        %984 = vmatprep.subr.bf16.mxu0 0
        %985 = vmatpush1.bf16.xpose.msra.mxu0 0
        %986 = vmatprep.subr.bf16.mxu0 0
        %987 = vmatpush1.bf16.xpose.msra.mxu0 0
        %988 = vmatprep.subr.bf16.mxu0 0
        %989 = vmatpush1.bf16.xpose.msra.mxu0 0
        %990 = vmatprep.subr.bf16.mxu0 0
        %991 = vmatpush1.bf16.xpose.msra.mxu0 %v843
        %992 = vmatprep.subr.bf16.mxu0 0
        %993 = vmatpush2.bf16.xpose.msra.mxu0 0
        %994 = vmatprep.subr.bf16.mxu0 0
        %995 = vmatpush2.bf16.xpose.msra.mxu0 0
        %996 = vmatprep.subr.bf16.mxu0 0
        %997 = vmatpush2.bf16.xpose.msra.mxu0 0
        %998 = vmatprep.subr.bf16.mxu0 0
        %999 = vmatpush2.bf16.xpose.msra.mxu0 0
        %1000 = vmatprep.subr.bf16.mxu0 0
        %1001 = vmatpush2.bf16.xpose.msra.mxu0 0
        %1002 = vmatprep.subr.bf16.mxu0 0
        %1003 = vmatpush2.bf16.xpose.msra.mxu0 0
        %1004 = vmatprep.subr.bf16.mxu0 0
        %1005 = vmatpush2.bf16.xpose.msra.mxu0 0
        %1006 = vmatprep.subr.bf16.mxu0 0
        %1007 = vmatpush2.bf16.xpose.msra.mxu0 0
        %1008 = vmatprep.mubr.bf16.mxu0 0
        %1009 = vmatmul.mubr.bf16.gmra.mxu0 %v809
        %v1010 = vpop.f32.mrf.mxu0
        %v1011 = vadd.f32 0.0, %v1010
        %v1012 = vpop.f32.mrf.mxu0
        %v1013 = vpop.f32.mrf.mxu0
        %v1014 = vpop.f32.mrf.mxu0
        %1015 = vdwg.mxu0
        %vm1016 = vcmask 27648
        %v1017 = vsel %vm1016, %v891, -inf
        %1018 = vmax.xlane.f32.xlu0 %v1017
        %v1019 = vpop.xlane.xlu0 %1018
        %v1020 = vsel %vm1016, %v931, -inf
        %1021 = vmax.xlane.f32.xlu0 %v1020
        %v1022 = vpop.xlane.xlu0 %1021
        %v1023 = vsel %vm1016, %v971, -inf
        %1024 = vmax.xlane.f32.xlu0 %v1023
        %v1025 = vpop.xlane.xlu0 %1024
        %v1026 = vsel %vm1016, %v1011, -inf
        %1027 = vmax.xlane.f32.xlu0 %v1026
        %v1028 = vpop.xlane.xlu0 %1027
        %v1029 = vmax.f32 %v1019, %v1025
        %v1030 = vmax.f32 %v1022, %v1028
        %v1031 = vsub.f32 %v891, %v1029
        %v1032 = vsub.f32 %v931, %v1030
        %v1033 = vmul.f32 %v1031, 1.442695
        %v1034 = vpow.pop %v1033
        %v1035 = vmul.f32 %v1032, 1.442695
        %v1036 = vpow.pop %v1035
        %v1037 = vsub.f32 %v971, %v1029
        %v1038 = vsub.f32 %v1011, %v1030
        %v1039 = vmul.f32 %v1037, 1.442695
        %v1040 = vpow.pop %v1039
        %v1041 = vmul.f32 %v1038, 1.442695
        %v1042 = vpow.pop %v1041
        %v1043 = vsel %vm1016, %v1034, 0.0
        %1044 = vadd.xlane.f32.xlu0 %v1043
        %v1045 = vpop.xlane.xlu0 %1044
        %v1046 = vsel %vm1016, %v1036, 0.0
        %1047 = vadd.xlane.f32.xlu0 %v1046
        %v1048 = vpop.xlane.xlu0 %1047
        %v1049 = vsel %vm1016, %v1040, 0.0
        %1050 = vadd.xlane.f32.xlu0 %v1049
        %v1051 = vpop.xlane.xlu0 %1050
        %v1052 = vsel %vm1016, %v1042, 0.0
        %1053 = vadd.xlane.f32.xlu0 %v1052
        %v1054 = vpop.xlane.xlu0 %1053
        %v1055 = vadd.f32 %v1045, %v1051
        %v1056 = vadd.f32 %v1048, %v1054
        %v1057 = vrcp.pop %v1055
        %v1058 = vmul.f32 1.0, %v1057
        %v1059 = vrcp.pop %v1056
        %v1060 = vmul.f32 1.0, %v1059
        %v1061 = vmul.f32 %v1034, %v1058
        %v1062 = vmul.f32 %v1036, %v1060
        %v1063 = vpack.c.bf16 %v1061, %v1061
        %v1064 = vpack.c.bf16 %v1062, %v1062
        %v1065 = vmul.f32 %v1040, %v1058
        %v1066 = vmul.f32 %v1042, %v1060
        %v1067 = vpack.c.bf16 %v1065, %v1065
        %v1068 = vpack.c.bf16 %v1066, %v1066
        %vm1069 = vcmask 31744
        %v1071 = vsel %vm1069, %v1067, 0
        %vm1073 = vcmask 1041408
        %v1075 = vsel %vm1073, %v854, 0
        %1077 = vmatprep.subr.bf16.mxu0 0
        %1078 = vmatpush1.bf16.msra.mxu0 0
        %1079 = vmatprep.subr.bf16.mxu0 0
        %1080 = vmatpush1.bf16.msra.mxu0 0
        %1081 = vmatprep.subr.bf16.mxu0 0
        %1082 = vmatpush1.bf16.msra.mxu0 0
        %1083 = vmatprep.subr.bf16.mxu0 0
        %1084 = vmatpush1.bf16.msra.mxu0 0
        %1085 = vmatprep.subr.bf16.mxu0 0
        %1086 = vmatpush1.bf16.msra.mxu0 0
        %1087 = vmatprep.subr.bf16.mxu0 0
        %1088 = vmatpush1.bf16.msra.mxu0 0
        %1089 = vmatprep.subr.bf16.mxu0 0
        %1090 = vmatpush1.bf16.msra.mxu0 0
        %1091 = vmatprep.subr.bf16.mxu0 0
        %1092 = vmatpush1.bf16.msra.mxu0 %v1075
        %1093 = vmatprep.subr.bf16.mxu0 0
        %1094 = vmatpush2.bf16.msra.mxu0 0
        %1095 = vmatprep.subr.bf16.mxu0 0
        %1096 = vmatpush2.bf16.msra.mxu0 0
        %1097 = vmatprep.subr.bf16.mxu0 0
        %1098 = vmatpush2.bf16.msra.mxu0 0
        %1099 = vmatprep.subr.bf16.mxu0 0
        %1100 = vmatpush2.bf16.msra.mxu0 0
        %1101 = vmatprep.subr.bf16.mxu0 0
        %1102 = vmatpush2.bf16.msra.mxu0 0
        %1103 = vmatprep.subr.bf16.mxu0 0
        %1104 = vmatpush2.bf16.msra.mxu0 0
        %1105 = vmatprep.subr.bf16.mxu0 0
        %1106 = vmatpush2.bf16.msra.mxu0 0
        %1107 = vmatprep.subr.bf16.mxu0 0
        %1108 = vmatpush2.bf16.msra.mxu0 0
        %1109 = vmatprep.mubr.bf16.mxu0 0
        %1110 = vmatmul.mubr.bf16.gmra.mxu0 %v1071
        %v1111 = vpop.f32.mrf.mxu0
        %v1112 = vadd.f32 0.0, %v1111
        %v1113 = vpop.f32.mrf.mxu0
        %v1114 = vpop.f32.mrf.mxu0
        %v1115 = vpop.f32.mrf.mxu0
        %1116 = vdwg.mxu0
        %v1118 = vsel %vm1069, %v1068, 0
        %v1121 = vsel %vm1073, %v855, 0
        %1123 = vmatprep.subr.bf16.mxu0 0
        %1124 = vmatpush1.bf16.msra.mxu0 0
        %1125 = vmatprep.subr.bf16.mxu0 0
        %1126 = vmatpush1.bf16.msra.mxu0 0
        %1127 = vmatprep.subr.bf16.mxu0 0
        %1128 = vmatpush1.bf16.msra.mxu0 0
        %1129 = vmatprep.subr.bf16.mxu0 0
        %1130 = vmatpush1.bf16.msra.mxu0 0
        %1131 = vmatprep.subr.bf16.mxu0 0
        %1132 = vmatpush1.bf16.msra.mxu0 0
        %1133 = vmatprep.subr.bf16.mxu0 0
        %1134 = vmatpush1.bf16.msra.mxu0 0
        %1135 = vmatprep.subr.bf16.mxu0 0
        %1136 = vmatpush1.bf16.msra.mxu0 0
        %1137 = vmatprep.subr.bf16.mxu0 0
        %1138 = vmatpush1.bf16.msra.mxu0 %v1121
        %1139 = vmatprep.subr.bf16.mxu0 0
        %1140 = vmatpush2.bf16.msra.mxu0 0
        %1141 = vmatprep.subr.bf16.mxu0 0
        %1142 = vmatpush2.bf16.msra.mxu0 0
        %1143 = vmatprep.subr.bf16.mxu0 0
        %1144 = vmatpush2.bf16.msra.mxu0 0
        %1145 = vmatprep.subr.bf16.mxu0 0
        %1146 = vmatpush2.bf16.msra.mxu0 0
        %1147 = vmatprep.subr.bf16.mxu0 0
        %1148 = vmatpush2.bf16.msra.mxu0 0
        %1149 = vmatprep.subr.bf16.mxu0 0
        %1150 = vmatpush2.bf16.msra.mxu0 0
        %1151 = vmatprep.subr.bf16.mxu0 0
        %1152 = vmatpush2.bf16.msra.mxu0 0
        %1153 = vmatprep.subr.bf16.mxu0 0
        %1154 = vmatpush2.bf16.msra.mxu0 0
        %1155 = vmatprep.mubr.bf16.mxu0 0
        %1156 = vmatmul.mubr.bf16.gmra.mxu0 %v1118
        %v1157 = vpop.f32.mrf.mxu0
        %v1158 = vadd.f32 0.0, %v1157
        %v1159 = vpop.f32.mrf.mxu0
        %v1160 = vpop.f32.mrf.mxu0
        %v1161 = vpop.f32.mrf.mxu0
        %1162 = vdwg.mxu0
        %v1164 = vsel %vm1069, %v1063, 0
        %v1167 = vsel %vm1073, %v832, 0
        %1169 = vmatprep.subr.bf16.mxu0 0
        %1170 = vmatpush1.bf16.msra.mxu0 0
        %1171 = vmatprep.subr.bf16.mxu0 0
        %1172 = vmatpush1.bf16.msra.mxu0 0
        %1173 = vmatprep.subr.bf16.mxu0 0
        %1174 = vmatpush1.bf16.msra.mxu0 0
        %1175 = vmatprep.subr.bf16.mxu0 0
        %1176 = vmatpush1.bf16.msra.mxu0 0
        %1177 = vmatprep.subr.bf16.mxu0 0
        %1178 = vmatpush1.bf16.msra.mxu0 0
        %1179 = vmatprep.subr.bf16.mxu0 0
        %1180 = vmatpush1.bf16.msra.mxu0 0
        %1181 = vmatprep.subr.bf16.mxu0 0
        %1182 = vmatpush1.bf16.msra.mxu0 0
        %1183 = vmatprep.subr.bf16.mxu0 0
        %1184 = vmatpush1.bf16.msra.mxu0 %v1167
        %1185 = vmatprep.subr.bf16.mxu0 0
        %1186 = vmatpush2.bf16.msra.mxu0 0
        %1187 = vmatprep.subr.bf16.mxu0 0
        %1188 = vmatpush2.bf16.msra.mxu0 0
        %1189 = vmatprep.subr.bf16.mxu0 0
        %1190 = vmatpush2.bf16.msra.mxu0 0
        %1191 = vmatprep.subr.bf16.mxu0 0
        %1192 = vmatpush2.bf16.msra.mxu0 0
        %1193 = vmatprep.subr.bf16.mxu0 0
        %1194 = vmatpush2.bf16.msra.mxu0 0
        %1195 = vmatprep.subr.bf16.mxu0 0
        %1196 = vmatpush2.bf16.msra.mxu0 0
        %1197 = vmatprep.subr.bf16.mxu0 0
        %1198 = vmatpush2.bf16.msra.mxu0 0
        %1199 = vmatprep.subr.bf16.mxu0 0
        %1200 = vmatpush2.bf16.msra.mxu0 0
        %1201 = vmatprep.mubr.bf16.mxu0 0
        %1202 = vmatmul.mubr.bf16.gmra.mxu0 %v1164
        %v1203 = vpop.f32.mrf.mxu0
        %v1204 = vadd.f32 %v1112, %v1203
        %v1205 = vpop.f32.mrf.mxu0
        %v1206 = vpop.f32.mrf.mxu0
        %v1207 = vpop.f32.mrf.mxu0
        %1208 = vdwg.mxu0
        %v1210 = vsel %vm1069, %v1064, 0
        %v1213 = vsel %vm1073, %v833, 0
        %1215 = vmatprep.subr.bf16.mxu0 0
        %1216 = vmatpush1.bf16.msra.mxu0 0
        %1217 = vmatprep.subr.bf16.mxu0 0
        %1218 = vmatpush1.bf16.msra.mxu0 0
        %1219 = vmatprep.subr.bf16.mxu0 0
        %1220 = vmatpush1.bf16.msra.mxu0 0
        %1221 = vmatprep.subr.bf16.mxu0 0
        %1222 = vmatpush1.bf16.msra.mxu0 0
        %1223 = vmatprep.subr.bf16.mxu0 0
        %1224 = vmatpush1.bf16.msra.mxu0 0
        %1225 = vmatprep.subr.bf16.mxu0 0
        %1226 = vmatpush1.bf16.msra.mxu0 0
        %1227 = vmatprep.subr.bf16.mxu0 0
        %1228 = vmatpush1.bf16.msra.mxu0 0
        %1229 = vmatprep.subr.bf16.mxu0 0
        %1230 = vmatpush1.bf16.msra.mxu0 %v1213
        %1231 = vmatprep.subr.bf16.mxu0 0
        %1232 = vmatpush2.bf16.msra.mxu0 0
        %1233 = vmatprep.subr.bf16.mxu0 0
        %1234 = vmatpush2.bf16.msra.mxu0 0
        %1235 = vmatprep.subr.bf16.mxu0 0
        %1236 = vmatpush2.bf16.msra.mxu0 0
        %1237 = vmatprep.subr.bf16.mxu0 0
        %1238 = vmatpush2.bf16.msra.mxu0 0
        %1239 = vmatprep.subr.bf16.mxu0 0
        %1240 = vmatpush2.bf16.msra.mxu0 0
        %1241 = vmatprep.subr.bf16.mxu0 0
        %1242 = vmatpush2.bf16.msra.mxu0 0
        %1243 = vmatprep.subr.bf16.mxu0 0
        %1244 = vmatpush2.bf16.msra.mxu0 0
        %1245 = vmatprep.subr.bf16.mxu0 0
        %1246 = vmatpush2.bf16.msra.mxu0 0
        %1247 = vmatprep.mubr.bf16.mxu0 0
        %1248 = vmatmul.mubr.bf16.gmra.mxu0 %v1210
        %v1249 = vpop.f32.mrf.mxu0
        %v1250 = vadd.f32 %v1158, %v1249
        %v1251 = vpop.f32.mrf.mxu0
        %v1252 = vpop.f32.mrf.mxu0
        %v1253 = vpop.f32.mrf.mxu0
        %1254 = vdwg.mxu0
        %v1255 = vunpack.c.l.bf16 %v492
        %v1256 = vunpack.c.l.bf16 %v493
        %v1257 = vadd.f32 %v1255, %v1204
        %v1258 = vadd.f32 %v1256, %v1250
        %v1259 = vld [vmem:[%s3] sm:$0x1]
        %v1260 = vld [vmem:[%s4] sm:$0x1]
        %v1263 = vcombine.low %v1257, %v1258
        %1265 = vadd.xlane.f32.xlu0 %v1263
        %v1266 = vpop.xlane.xlu0 %1265
        %v1267 = vrcp.pop 128.0
        %v1268 = vmul.f32 %v1266, %v1267
        %v1271 = vunpack.c.l.s4 839922192
        %v1272 = vunpack.c.0.s8 %v1271
        %v1273 = vlaneseq
        %v1274 = vshrl.u32 %v1273, 7
        %v1275 = vsub.s32 %v1272, %v1274
        %v1276 = vrot.slane %v1268, %v1275
        %v1278 = vunpack.c.l.s4 1985246804
        %v1279 = vunpack.c.0.s8 %v1278
        %v1280 = vlaneseq
        %v1281 = vshrl.u32 %v1280, 7
        %v1282 = vsub.s32 %v1279, %v1281
        %v1283 = vrot.slane %v1268, %v1282
        %v1286 = vsub.f32 %v1257, %v1276
        %v1287 = vsub.f32 %v1258, %v1283
        %v1288 = vmul.f32 %v1286, %v1286
        %v1289 = vmul.f32 %v1287, %v1287
        %v1292 = vcombine.low %v1288, %v1289
        %1294 = vadd.xlane.f32.xlu0 %v1292
        %v1295 = vpop.xlane.xlu0 %1294
        %v1296 = vmul.f32 %v1295, %v1267
        %v1297 = vadd.f32 %v1296, 1e-05
        %v1298 = vrsqrt.pop %v1297
        %v1301 = vunpack.c.l.s4 839922192
        %v1302 = vunpack.c.0.s8 %v1301
        %v1303 = vlaneseq
        %v1304 = vshrl.u32 %v1303, 7
        %v1305 = vsub.s32 %v1302, %v1304
        %v1306 = vrot.slane %v1298, %v1305
        %v1308 = vunpack.c.l.s4 1985246804
        %v1309 = vunpack.c.0.s8 %v1308
        %v1310 = vlaneseq
        %v1311 = vshrl.u32 %v1310, 7
        %v1312 = vsub.s32 %v1309, %v1311
        %v1313 = vrot.slane %v1298, %v1312
        %v1316 = vmul.f32 %v1286, %v1306
        %v1317 = vmul.f32 %v1287, %v1313
        %v1319 = vlaneseq
        %v1320 = vshrl.u32 %v1319, 7
        %v1321 = vsub.s32 0, %v1320
        %v1322 = vrot.slane %v1259, %v1321
        %v1324 = vcombine.high %v1322, %v1322
        %v1326 = vmul.f32 %v1316, %v1322
        %v1327 = vmul.f32 %v1317, %v1324
        %v1329 = vlaneseq
        %v1330 = vshrl.u32 %v1329, 7
        %v1331 = vsub.s32 0, %v1330
        %v1332 = vrot.slane %v1260, %v1331
        %v1334 = vcombine.high %v1332, %v1332
        %v1336 = vadd.f32 %v1326, %v1332
        %v1337 = vadd.f32 %v1327, %v1334
        %v1340 = vcombine.low %v1336, %v1337
        %v1342 = vpack.c.bf16 %v1340, %v1340
        %v1343 = vld [vmem:[#allocation8] sm:$0xf]
        %v1344 = vld [vmem:[#allocation8 + $0x4] sm:$0xf]
        %v1345 = vld [vmem:[#allocation8 + $0x8] sm:$0xf]
        %v1346 = vld [vmem:[#allocation8 + $0xc] sm:$0xf]
        %v1347 = vld [vmem:[#allocation8 + $0x10] sm:$0xf]
        %v1348 = vld [vmem:[#allocation8 + $0x14] sm:$0xf]
        %v1349 = vld [vmem:[#allocation8 + $0x18] sm:$0xf]
        %v1350 = vld [vmem:[#allocation8 + $0x1c] sm:$0xf]
        %v1351 = vld [vmem:[#allocation8 + $0x20] sm:$0xf]
        %v1352 = vld [vmem:[#allocation8 + $0x24] sm:$0xf]
        %v1353 = vld [vmem:[#allocation8 + $0x28] sm:$0xf]
        %v1354 = vld [vmem:[#allocation8 + $0x2c] sm:$0xf]
        %v1355 = vld [vmem:[#allocation8 + $0x30] sm:$0xf]
        %v1356 = vld [vmem:[#allocation8 + $0x34] sm:$0xf]
        %v1357 = vld [vmem:[#allocation8 + $0x38] sm:$0xf]
        %v1358 = vld [vmem:[#allocation8 + $0x3c] sm:$0xf]
        %v1359 = vld [vmem:[%s6] sm:$0x1]
        %v1361 = vlaneseq
        %v1362 = vshrl.u32 %v1361, 7
        %v1363 = vsub.s32 0, %v1362
        %v1364 = vrot.slane %v1359, %v1363
        %v1382 = vunpack.c.l.b16 %v1343
        %v1383 = vunpack.c.l.b16 %v1344
        %v1384 = vunpack.c.l.b16 %v1345
        %v1385 = vunpack.c.l.b16 %v1346
        %v1386 = vunpack.c.l.b16 %v1347
        %v1387 = vunpack.c.l.b16 %v1348
        %v1388 = vunpack.c.l.b16 %v1349
        %v1389 = vunpack.c.l.b16 %v1350
        %v1390 = vunpack.c.l.b16 %v1351
        %v1391 = vunpack.c.l.b16 %v1352
        %v1392 = vunpack.c.l.b16 %v1353
        %v1393 = vunpack.c.l.b16 %v1354
        %v1394 = vunpack.c.l.b16 %v1355
        %v1395 = vunpack.c.l.b16 %v1356
        %v1396 = vunpack.c.l.b16 %v1357
        %v1397 = vunpack.c.l.b16 %v1358
        %v1398 = vpack.c.b16 %v1383, %v1382
        %v1399 = vpack.c.b16 %v1385, %v1384
        %v1400 = vpack.c.b16 %v1387, %v1386
        %v1401 = vpack.c.b16 %v1389, %v1388
        %v1402 = vpack.c.b16 %v1391, %v1390
        %v1403 = vpack.c.b16 %v1393, %v1392
        %v1404 = vpack.c.b16 %v1395, %v1394
        %v1405 = vpack.c.b16 %v1397, %v1396
        %1414 = vmatprep.subr.bf16.mxu0 0
        %1415 = vmatpush1.bf16.msra.mxu0 %v1405
        %1416 = vmatprep.subr.bf16.mxu0 0
        %1417 = vmatpush1.bf16.msra.mxu0 %v1404
        %1418 = vmatprep.subr.bf16.mxu0 0
        %1419 = vmatpush1.bf16.msra.mxu0 %v1403
        %1420 = vmatprep.subr.bf16.mxu0 0
        %1421 = vmatpush1.bf16.msra.mxu0 %v1402
        %1422 = vmatprep.subr.bf16.mxu0 0
        %1423 = vmatpush1.bf16.msra.mxu0 %v1401
        %1424 = vmatprep.subr.bf16.mxu0 0
        %1425 = vmatpush1.bf16.msra.mxu0 %v1400
        %1426 = vmatprep.subr.bf16.mxu0 0
        %1427 = vmatpush1.bf16.msra.mxu0 %v1399
        %1428 = vmatprep.subr.bf16.mxu0 0
        %1429 = vmatpush1.bf16.msra.mxu0 %v1398
        %1430 = vmatprep.subr.bf16.mxu0 0
        %1431 = vmatpush2.bf16.msra.mxu0 0
        %1432 = vmatprep.subr.bf16.mxu0 0
        %1433 = vmatpush2.bf16.msra.mxu0 0
        %1434 = vmatprep.subr.bf16.mxu0 0
        %1435 = vmatpush2.bf16.msra.mxu0 0
        %1436 = vmatprep.subr.bf16.mxu0 0
        %1437 = vmatpush2.bf16.msra.mxu0 0
        %1438 = vmatprep.subr.bf16.mxu0 0
        %1439 = vmatpush2.bf16.msra.mxu0 0
        %1440 = vmatprep.subr.bf16.mxu0 0
        %1441 = vmatpush2.bf16.msra.mxu0 0
        %1442 = vmatprep.subr.bf16.mxu0 0
        %1443 = vmatpush2.bf16.msra.mxu0 0
        %1444 = vmatprep.subr.bf16.mxu0 0
        %1445 = vmatpush2.bf16.msra.mxu0 0
        %1446 = vmatprep.mubr.bf16.mxu0 0
        %1447 = vmatmul.mubr.bf16.gmra.mxu0 %v1342
        %v1448 = vpop.f32.mrf.mxu0
        %v1449 = vadd.f32 %v1364, %v1448
        %v1450 = vpop.f32.mrf.mxu0
        %v1451 = vpop.f32.mrf.mxu0
        %v1452 = vpop.f32.mrf.mxu0
        %1453 = vdwg.mxu0
        %v1454 = vmax.f32 %v1449, 0.0
        %v1455 = vpack.c.bf16 %v1454, %v1454
        %v1456 = vld [vmem:[#allocation10] sm:$0xf]
        %v1457 = vld [vmem:[#allocation10 + $0x4] sm:$0xf]
        %v1458 = vld [vmem:[#allocation10 + $0x8] sm:$0xf]
        %v1459 = vld [vmem:[#allocation10 + $0xc] sm:$0xf]
        %v1460 = vld [vmem:[#allocation10 + $0x10] sm:$0xf]
        %v1461 = vld [vmem:[#allocation10 + $0x14] sm:$0xf]
        %v1462 = vld [vmem:[#allocation10 + $0x18] sm:$0xf]
        %v1463 = vld [vmem:[#allocation10 + $0x1c] sm:$0xf]
        %v1464 = vld [vmem:[#allocation10 + $0x20] sm:$0xf]
        %v1465 = vld [vmem:[#allocation10 + $0x24] sm:$0xf]
        %v1466 = vld [vmem:[#allocation10 + $0x28] sm:$0xf]
        %v1467 = vld [vmem:[#allocation10 + $0x2c] sm:$0xf]
        %v1468 = vld [vmem:[#allocation10 + $0x30] sm:$0xf]
        %v1469 = vld [vmem:[#allocation10 + $0x34] sm:$0xf]
        %v1470 = vld [vmem:[#allocation10 + $0x38] sm:$0xf]
        %v1471 = vld [vmem:[#allocation10 + $0x3c] sm:$0xf]
        %v1472 = vld [vmem:[%s8] sm:$0x1]
        %v1474 = vlaneseq
        %v1475 = vshrl.u32 %v1474, 7
        %v1476 = vsub.s32 0, %v1475
        %v1477 = vrot.slane %v1472, %v1476
        %v1495 = vunpack.c.l.b16 %v1456
        %v1496 = vunpack.c.l.b16 %v1457
        %v1497 = vunpack.c.l.b16 %v1458
        %v1498 = vunpack.c.l.b16 %v1459
        %v1499 = vunpack.c.l.b16 %v1460
        %v1500 = vunpack.c.l.b16 %v1461
        %v1501 = vunpack.c.l.b16 %v1462
        %v1502 = vunpack.c.l.b16 %v1463
        %v1503 = vunpack.c.l.b16 %v1464
        %v1504 = vunpack.c.l.b16 %v1465
        %v1505 = vunpack.c.l.b16 %v1466
        %v1506 = vunpack.c.l.b16 %v1467
        %v1507 = vunpack.c.l.b16 %v1468
        %v1508 = vunpack.c.l.b16 %v1469
        %v1509 = vunpack.c.l.b16 %v1470
        %v1510 = vunpack.c.l.b16 %v1471
        %v1511 = vpack.c.b16 %v1496, %v1495
        %v1512 = vpack.c.b16 %v1498, %v1497
        %v1513 = vpack.c.b16 %v1500, %v1499
        %v1514 = vpack.c.b16 %v1502, %v1501
        %v1515 = vpack.c.b16 %v1504, %v1503
        %v1516 = vpack.c.b16 %v1506, %v1505
        %v1517 = vpack.c.b16 %v1508, %v1507
        %v1518 = vpack.c.b16 %v1510, %v1509
        %1527 = vmatprep.subr.bf16.mxu0 0
        %1528 = vmatpush1.bf16.msra.mxu0 %v1518
        %1529 = vmatprep.subr.bf16.mxu0 0
        %1530 = vmatpush1.bf16.msra.mxu0 %v1517
        %1531 = vmatprep.subr.bf16.mxu0 0
        %1532 = vmatpush1.bf16.msra.mxu0 %v1516
        %1533 = vmatprep.subr.bf16.mxu0 0
        %1534 = vmatpush1.bf16.msra.mxu0 %v1515
        %1535 = vmatprep.subr.bf16.mxu0 0
        %1536 = vmatpush1.bf16.msra.mxu0 %v1514
        %1537 = vmatprep.subr.bf16.mxu0 0
        %1538 = vmatpush1.bf16.msra.mxu0 %v1513
        %1539 = vmatprep.subr.bf16.mxu0 0
        %1540 = vmatpush1.bf16.msra.mxu0 %v1512
        %1541 = vmatprep.subr.bf16.mxu0 0
        %1542 = vmatpush1.bf16.msra.mxu0 %v1511
        %1543 = vmatprep.subr.bf16.mxu0 0
        %1544 = vmatpush2.bf16.msra.mxu0 0
        %1545 = vmatprep.subr.bf16.mxu0 0
        %1546 = vmatpush2.bf16.msra.mxu0 0
        %1547 = vmatprep.subr.bf16.mxu0 0
        %1548 = vmatpush2.bf16.msra.mxu0 0
        %1549 = vmatprep.subr.bf16.mxu0 0
        %1550 = vmatpush2.bf16.msra.mxu0 0
        %1551 = vmatprep.subr.bf16.mxu0 0
        %1552 = vmatpush2.bf16.msra.mxu0 0
        %1553 = vmatprep.subr.bf16.mxu0 0
        %1554 = vmatpush2.bf16.msra.mxu0 0
        %1555 = vmatprep.subr.bf16.mxu0 0
        %1556 = vmatpush2.bf16.msra.mxu0 0
        %1557 = vmatprep.subr.bf16.mxu0 0
        %1558 = vmatpush2.bf16.msra.mxu0 0
        %1559 = vmatprep.mubr.bf16.mxu0 0
        %1560 = vmatmul.mubr.bf16.gmra.mxu0 %v1455
        %v1561 = vpop.f32.mrf.mxu0
        %v1562 = vadd.f32 %v1477, %v1561
        %v1563 = vpop.f32.mrf.mxu0
        %v1564 = vpop.f32.mrf.mxu0
        %v1565 = vpop.f32.mrf.mxu0
        %1566 = vdwg.mxu0
        %v1568 = vcombine.high %v1562, %v1562
        %v1570 = vadd.f32 %v1336, %v1562
        %v1571 = vadd.f32 %v1337, %v1568
        %v1572 = vld [vmem:[%s9] sm:$0x1]
        %v1573 = vld [vmem:[%s10] sm:$0x1]
        %v1576 = vcombine.low %v1570, %v1571
        %1578 = vadd.xlane.f32.xlu0 %v1576
        %v1579 = vpop.xlane.xlu0 %1578
        %v1580 = vmul.f32 %v1579, %v1267
        %v1583 = vunpack.c.l.s4 839922192
        %v1584 = vunpack.c.0.s8 %v1583
        %v1585 = vlaneseq
        %v1586 = vshrl.u32 %v1585, 7
        %v1587 = vsub.s32 %v1584, %v1586
        %v1588 = vrot.slane %v1580, %v1587
        %v1590 = vunpack.c.l.s4 1985246804
        %v1591 = vunpack.c.0.s8 %v1590
        %v1592 = vlaneseq
        %v1593 = vshrl.u32 %v1592, 7
        %v1594 = vsub.s32 %v1591, %v1593
        %v1595 = vrot.slane %v1580, %v1594
        %v1598 = vsub.f32 %v1570, %v1588
        %v1599 = vsub.f32 %v1571, %v1595
        %v1600 = vmul.f32 %v1598, %v1598
        %v1601 = vmul.f32 %v1599, %v1599
        %v1604 = vcombine.low %v1600, %v1601
        %1606 = vadd.xlane.f32.xlu0 %v1604
        %v1607 = vpop.xlane.xlu0 %1606
        %v1608 = vmul.f32 %v1607, %v1267
        %v1609 = vadd.f32 %v1608, 1e-05
        %v1610 = vrsqrt.pop %v1609
        %v1613 = vunpack.c.l.s4 839922192
        %v1614 = vunpack.c.0.s8 %v1613
        %v1615 = vlaneseq
        %v1616 = vshrl.u32 %v1615, 7
        %v1617 = vsub.s32 %v1614, %v1616
        %v1618 = vrot.slane %v1610, %v1617
        %v1620 = vunpack.c.l.s4 1985246804
        %v1621 = vunpack.c.0.s8 %v1620
        %v1622 = vlaneseq
        %v1623 = vshrl.u32 %v1622, 7
        %v1624 = vsub.s32 %v1621, %v1623
        %v1625 = vrot.slane %v1610, %v1624
        %v1628 = vmul.f32 %v1598, %v1618
        %v1629 = vmul.f32 %v1599, %v1625
        %v1631 = vlaneseq
        %v1632 = vshrl.u32 %v1631, 7
        %v1633 = vsub.s32 0, %v1632
        %v1634 = vrot.slane %v1572, %v1633
        %v1636 = vcombine.high %v1634, %v1634
        %v1638 = vmul.f32 %v1628, %v1634
        %v1639 = vmul.f32 %v1629, %v1636
        %v1641 = vlaneseq
        %v1642 = vshrl.u32 %v1641, 7
        %v1643 = vsub.s32 0, %v1642
        %v1644 = vrot.slane %v1573, %v1643
        %v1646 = vcombine.high %v1644, %v1644
        %v1648 = vadd.f32 %v1638, %v1644
        %v1649 = vadd.f32 %v1639, %v1646
        %v1650 = vpack.c.bf16 %v1648, %v1648
        %v1651 = vpack.c.bf16 %v1649, %v1649
        %1652 = vst [vmem:[%s487] sm:$0x3] %v1650
        %1653 = vst [vmem:[%s487 + $0x2] sm:$0x3] %v1651
        %s1654 = sand.u32 %s281, 1
        %s1655 = scalar_lea.sflag [#allocation4], %s1654
        %s1656 = sand.u32 %s281, 1
        %s1657 = smul.addr %s1656, 4
        %s1658 = scalar_lea.vmem [#allocation11], %s1657
        // Predicated region
        $region85: #{tpu_custom_call.1} parent=63 // pred_check
          %p1659 = pneg %p291
        $region86: #{tpu_custom_call.1} parent=63 // pred_check_branch
          %1661 = sbr.rel (%p1659) target = $region88
        $region87: #{tpu_custom_call.1} parent=63 // pred_region
          %s1662 = smul.u32 2, %s32
          %s1664 = ssub.s32 64, 64
          %1665 = vsyncadd %s1655, %s1664
          %s1666 = smul.addr %s1662, 32
          %s1667 = scalar_lea.hbm %s11, %s1666
          %s1668 = sshll.u32 %s1658, 4
          %s1669 = int_to_ptr.vmem [resolvable:$true] %s1668
          %1674 = dma.vmem_to_hbm [thread:$0]  %s1669, 64, %s1667, %s1655, 32, 32, 2
        $region88: #{tpu_custom_call.1} parent=63 // pred_fallthru
          _
      $region64: #{tpu_custom_call.1} parent=5 // pred_fallthru
        _
      %p1675 = scmp.le.s32.totalorder 2, %s27
      // Predicated region
      $region89: #{tpu_custom_call.1} parent=5 // pred_check
        %p1676 = pneg %p1675
      $region90: #{tpu_custom_call.1} parent=5 // pred_check_branch
        %1678 = sbr.rel (%p1676) target = $region92
      $region91: #{tpu_custom_call.1} parent=5 // pred_region
        %s1679 = ssub.s32 %s27, 2
        // Predicated region
        $region93: #{tpu_custom_call.1} parent=91 // pred_check
          %p1680 = pneg %p297
        $region94: #{tpu_custom_call.1} parent=91 // pred_check_branch
          %1682 = sbr.rel (%p1680) target = $region96
        $region95: #{tpu_custom_call.1} parent=91 // pred_region
          %s1683 = sand.u32 %s282, 1
          %s1684 = scalar_lea.sflag [#allocation4], %s1683
          %s1685 = sand.u32 %s282, 1
          %s1686 = smul.addr %s1685, 4
          %s1687 = scalar_lea.vmem [#allocation11], %s1686
          %1688 = dma.done %s1684, 64
        $region96: #{tpu_custom_call.1} parent=91 // pred_fallthru
          _
      $region92: #{tpu_custom_call.1} parent=5 // pred_fallthru
        _
    $region6: #{tpu_custom_call.1} parent=1 // loop_footer
      %s31 = sadd.s32 1, %s27
    $region7: #{tpu_custom_call.1} parent=1 // loop_footer_branch
      %26 = sbr.rel target = $region3
    $region8: #{tpu_custom_call.1} parent=1 // loop_exit
      _
    %1689 = vsyncpa [#allocation3], 1
    %s1690 = scalar_lea.sflag [#allocation3], 1
    %1691 = vsyncpa %s1690, 1
    %1692 = vsyncpa [#allocation6], 1
    %s1693 = scalar_lea.sflag [#allocation6], 1
    %1694 = vsyncpa %s1693, 1
    %1695 = vsyncpa [#allocation9], 1
    %1696 = vsyncpa [#allocation4], 1
    %s1697 = scalar_lea.sflag [#allocation4], 1
    %1698 = vsyncpa %s1697, 1

</llo_original>
